<compile_context>
chip_gen: v7x
topology: tpu7x:2x2x1
jax: 0.10.0
libtpu: 0.0.40
codegen_flags: <defaults>
</compile_context>

<pallas_src>
import functools

import jax
import jax.numpy as jnp
from jax.experimental import pallas as pl
from jax.experimental.pallas import tpu as pltpu


def _gru_recurrence_kernel(gi_ref, whh_ref, bhn_ref, h0_ref,
                           out_ref, hn_ref, h_sc,
                           *, t_chunk, h_pad, seq_len, s_pad, unroll):
    """Recurrent part of one GRU layer.

    Grid = (batch_blocks, time_chunks); axis 1 iterates sequentially over time
    chunks.  `gi_ref` holds the pre-computed input projections for this chunk,
    lane-stacked by gate: (t_chunk, b_blk, 3*h_pad).
    """
    c = pl.program_id(1)

    @pl.when(c == 0)
    def _():
        h_sc[...] = h0_ref[...].astype(jnp.float32)

    # Hoisted out of the serial loop (JAX does not CSE broadcast_in_dim).
    b_hn = jnp.broadcast_to(bhn_ref[...], h_sc.shape)        # (b_blk, h_pad)

    needs_guard = (s_pad != seq_len)                          # static
    base = c * t_chunk

    def step(i, h):
        g = gi_ref[i]                                         # (b_blk, 3*h_pad)
        # Single fused hidden GEMM: (b_blk, h_pad) x (h_pad, 3*h_pad).
        gh = jnp.dot(h, whh_ref[...], preferred_element_type=jnp.float32)
        # Gate slices are lane-aligned (h_pad % 128 == 0) -> zero-cost.
        r = jax.nn.sigmoid(g[:, :h_pad] + gh[:, :h_pad])
        z = jax.nn.sigmoid(g[:, h_pad:2 * h_pad] + gh[:, h_pad:2 * h_pad])
        n = jnp.tanh(g[:, 2 * h_pad:] + r * (gh[:, 2 * h_pad:] + b_hn))
        h_new = n + z * (h - n)                               # == (1-z)*n + z*h
        if needs_guard:
            # Padded tail timesteps must not advance the hidden state.
            h_new = jnp.where(base + i < seq_len, h_new, h)
        out_ref[i] = h_new.astype(out_ref.dtype)              # lane-dense vst
        return h_new

    h_final = jax.lax.fori_loop(0, t_chunk, step, h_sc[...], unroll=unroll)
    h_sc[...] = h_final                      # carry hidden state across chunks

    # Final hidden state: written once, on the last chunk only.
    @pl.when(c == pl.num_programs(1) - 1)
    def _():
        hn_ref[...] = h_final.astype(hn_ref.dtype)


def _vmem_capacity_bytes():
    try:
        return int(pltpu.get_tpu_info().vmem_capacity_bytes)
    except Exception:
        return 64 * 2 ** 20          # conservative (v7x-sized) fallback


def _plan_tiling(seq_len, batch, h_pad):
    """Batch blocking + budget-derived time chunking + VMEM limit."""
    # Batch: pad to a sublane multiple (>= 8).  If the batch is big enough,
    # split it into two blocks so v7x's second TensorCore gets half the rows
    # (the parallel grid axis is a no-op on 1-TC v5e/v6e).
    b_pad = max(8, -(-batch // 8) * 8)
    if b_pad >= 16:
        b_pad = -(-b_pad // 16) * 16
        b_blk = b_pad // 2
    else:
        b_blk = b_pad

    cap = _vmem_capacity_bytes()               # 64 MiB v7x, 128 MiB v5e/v6e
    budget = int(0.45 * cap)                   # headroom for compiler scratch
    f32 = 4
    resident = f32 * (h_pad * 3 * h_pad        # fused W_hh^T (single copy)
                      + h_pad                  # b_hn
                      + 3 * b_blk * h_pad)     # h0 (dbl-buffered) + h scratch
    per_t = f32 * b_blk * (3 * h_pad + h_pad) * 2   # dbl-buffered gi + out rows
    t_chunk = max(1, (budget - resident) // per_t)
    t_chunk = int(min(t_chunk, seq_len, 512))
    s_pad = -(-seq_len // t_chunk) * t_chunk   # pad S; never degrade t_chunk
    unroll = True if t_chunk <= 16 else 8

    est = resident + per_t * t_chunk + f32 * b_blk * h_pad
    vmem_limit = int(min(int(0.9 * cap), max(32 * 2 ** 20, int(1.5 * est))))
    return b_pad, b_blk, t_chunk, s_pad, unroll, vmem_limit


def _prep_gru_weights(w_ih, w_hh, b_ih, b_hh, hidden, h_pad, in_total):
    """Pad + fuse PyTorch-layout GRU weights for the lane-stacked kernel."""
    in_size = w_ih.shape[1]
    # Input projection: (in_total, 3*h_pad), gates stacked along lanes.
    w_ih_g = jnp.zeros((3, h_pad, in_total), w_ih.dtype)
    w_ih_g = w_ih_g.at[:, :hidden, :in_size].set(w_ih.reshape(3, hidden, in_size))
    w_ih_fused = w_ih_g.transpose(2, 0, 1).reshape(in_total, 3 * h_pad)
    # Fold b_ih + b_hr + b_hz into the input-side bias; b_hn must stay inside
    # the gate because of the r * (W_hn h + b_hn) structure.
    b_fold = b_ih + jnp.concatenate(
        [b_hh[:2 * hidden], jnp.zeros((hidden,), b_hh.dtype)])
    b_fold_p = jnp.zeros((3, h_pad), b_ih.dtype)
    b_fold_p = b_fold_p.at[:, :hidden].set(b_fold.reshape(3, hidden))
    b_fold_p = b_fold_p.reshape(3 * h_pad)
    # Hidden projection: fused, pre-transposed (h_pad, 3*h_pad).
    w_hh_g = jnp.zeros((3, h_pad, h_pad), w_hh.dtype)
    w_hh_g = w_hh_g.at[:, :hidden, :hidden].set(w_hh.reshape(3, hidden, hidden))
    w_hh_fused = w_hh_g.transpose(2, 0, 1).reshape(h_pad, 3 * h_pad)
    b_hn = jnp.zeros((1, h_pad), b_hh.dtype).at[0, :hidden].set(b_hh[2 * hidden:])
    return w_ih_fused, b_fold_p, w_hh_fused, b_hn


def _gru_layer_padded(x_pad, w_ih_fused, b_fold, w_hh_fused, b_hn, h0_pad,
                      *, seq_len, t_chunk, b_blk, unroll, vmem_limit):
    """One GRU layer on padded tensors: (s_pad, b_pad, in_total) -> padded out."""
    s_pad, b_pad, in_total = x_pad.shape
    h_pad = w_hh_fused.shape[0]
    num_chunks = s_pad // t_chunk
    n_b_blocks = b_pad // b_blk
    dtype = x_pad.dtype

    # Input projection hoisted out of the serial recurrence: one big MXU GEMM.
    gi = jnp.dot(x_pad.reshape(s_pad * b_pad, in_total), w_ih_fused,
                 preferred_element_type=jnp.float32) + b_fold
    gi = gi.reshape(s_pad, b_pad, 3 * h_pad)               # gates along lanes

    kernel = functools.partial(
        _gru_recurrence_kernel, t_chunk=t_chunk, h_pad=h_pad,
        seq_len=seq_len, s_pad=s_pad, unroll=unroll)

    out, h_n = pl.pallas_call(
        kernel,
        out_shape=(
            jax.ShapeDtypeStruct((s_pad, b_pad, h_pad), dtype),
            jax.ShapeDtypeStruct((b_pad, h_pad), dtype),
        ),
        grid_spec=pltpu.PrefetchScalarGridSpec(
            num_scalar_prefetch=0,
            grid=(n_b_blocks, num_chunks),
            in_specs=[
                # Streamed, time-chunked, lane-dense pre-computed input gates.
                pl.BlockSpec((t_chunk, b_blk, 3 * h_pad),
                             lambda bb, c: (c, bb, 0)),
                # Constants: single resident VMEM copy, no double buffering.
                pl.BlockSpec(memory_space=pltpu.MemorySpace.VMEM),  # W_hh fused
                pl.BlockSpec(memory_space=pltpu.MemorySpace.VMEM),  # b_hn
                pl.BlockSpec((b_blk, h_pad), lambda bb, c: (bb, 0)),  # h0
            ],
            out_specs=[
                pl.BlockSpec((t_chunk, b_blk, h_pad), lambda bb, c: (c, bb, 0)),
                pl.BlockSpec((b_blk, h_pad), lambda bb, c: (bb, 0)),
            ],
            scratch_shapes=[pltpu.VMEM((b_blk, h_pad), jnp.float32)],
        ),
        compiler_params=pltpu.CompilerParams(
            # Batch blocks are independent (v7x dual-TC); time is a recurrence.
            dimension_semantics=("parallel", "arbitrary"),
            vmem_limit_bytes=vmem_limit,
        ),
    )(gi, w_hh_fused, b_hn, h0_pad)
    return out, h_n


def base_rnn_forward(params, x, h0):
    """x: (S, B, I), h0: (n_layers, B, H) -> (S, B, H), (n_layers, B, H)."""
    seq_len, batch, in_size = x.shape
    n_layers, _, hidden = h0.shape
    h_pad = max(128, -(-hidden // 128) * 128)     # lane-aligned gate slices

    b_pad, b_blk, t_chunk, s_pad, unroll, vmem_limit = _plan_tiling(
        seq_len, batch, h_pad)

    # input_dropout / inter-layer dropout: identity (inference mode).
    x_pad = jnp.zeros((s_pad, b_pad, in_size), x.dtype).at[:seq_len, :batch].set(x)
    h0_pad = jnp.zeros((n_layers, b_pad, h_pad), h0.dtype).at[:, :batch, :hidden].set(h0)

    out = x_pad
    h_ns = []
    for layer, (w_ih, w_hh, b_ih, b_hh) in enumerate(params):
        in_total = out.shape[-1]                  # in_size for layer 0, h_pad after
        w_ih_f, b_fold, w_hh_f, b_hn = _prep_gru_weights(
            w_ih, w_hh, b_ih, b_hh, hidden, h_pad, in_total)
        out, h_n = _gru_layer_padded(
            out, w_ih_f, b_fold, w_hh_f, b_hn, h0_pad[layer],
            seq_len=seq_len, t_chunk=t_chunk, b_blk=b_blk,
            unroll=unroll, vmem_limit=vmem_limit)
        h_ns.append(h_n[:batch, :hidden])
    # TODO(synk): fuse the layer stack into a single pallas_call (activations
    # kept in VMEM across layers) to remove the per-layer HBM round trip.
    return out[:seq_len, :batch, :hidden], jnp.stack(h_ns, axis=0)


class BaseRNNPallas:
    """JAX/Pallas equivalent of BaseRNN configured with rnn_cell='gru'."""

    def __init__(self, vocab_size, max_len, hidden_size, input_dropout_p,
                 dropout_p, n_layers, rnn_cell, input_size, key):
        if rnn_cell.lower() != "gru":
            # TODO(synk): LSTM cell variant not implemented in this Pallas port.
            raise ValueError("Only 'gru' implemented in Pallas port")
        self.vocab_size = vocab_size
        self.max_len = max_len
        self.hidden_size = hidden_size
        self.n_layers = n_layers
        self.input_dropout_p = input_dropout_p
        self.dropout_p = dropout_p

        # Deterministic PyTorch-style init: U(-1/sqrt(H), 1/sqrt(H)).
        bound = 1.0 / (hidden_size ** 0.5)
        self.params = []
        k = key
        for layer in range(n_layers):
            in_sz = input_size if layer == 0 else hidden_size
            k, k1, k2, k3, k4 = jax.random.split(k, 5)
            w_ih = jax.random.uniform(k1, (3 * hidden_size, in_sz),
                                      jnp.float32, -bound, bound)
            w_hh = jax.random.uniform(k2, (3 * hidden_size, hidden_size),
                                      jnp.float32, -bound, bound)
            b_ih = jax.random.uniform(k3, (3 * hidden_size,),
                                      jnp.float32, -bound, bound)
            b_hh = jax.random.uniform(k4, (3 * hidden_size,),
                                      jnp.float32, -bound, bound)
            self.params.append((w_ih, w_hh, b_ih, b_hh))
        self._fwd = jax.jit(base_rnn_forward)

    def __call__(self, x, h0):
        return self._fwd(self.params, x, h0)


def _gru_reference(x, params, h0):
    """Pure-JAX reference (lax.scan) with identical PyTorch GRU semantics."""
    out = x
    h_ns = []
    for layer, (w_ih, w_hh, b_ih, b_hh) in enumerate(params):
        hidden = h0.shape[-1]

        def step(h, x_t):
            gi = x_t @ w_ih.T + b_ih
            gh = h @ w_hh.T + b_hh
            i_r, i_z, i_n = gi[:, :hidden], gi[:, hidden:2 * hidden], gi[:, 2 * hidden:]
            h_r, h_z, h_n = gh[:, :hidden], gh[:, hidden:2 * hidden], gh[:, 2 * hidden:]
            r = jax.nn.sigmoid(i_r + h_r)
            z = jax.nn.sigmoid(i_z + h_z)
            n = jnp.tanh(i_n + r * h_n)
            h_new = (1.0 - z) * n + z * h
            return h_new, h_new

        h_last, out = jax.lax.scan(step, h0[layer], out)
        h_ns.append(h_last)
    return out, jnp.stack(h_ns, axis=0)


if __name__ == "__main__":
    vocab_size = 10
    max_len = 8
    hidden_size = 32
    input_size = 32
    n_layers = 2
    batch = 2
    seq_len = 8

    key = jax.random.PRNGKey(0)
    k_model, k_x, k_h = jax.random.split(key, 3)

    model = BaseRNNPallas(
        vocab_size=vocab_size, max_len=max_len, hidden_size=hidden_size,
        input_dropout_p=0.1, dropout_p=0.1, n_layers=n_layers,
        rnn_cell="gru", input_size=input_size, key=k_model)

    x = jax.random.normal(k_x, (seq_len, batch, input_size), jnp.float32)
    h0 = jax.random.normal(k_h, (n_layers, batch, hidden_size), jnp.float32)

    out, h_n = model(x, h0)
    out = jax.block_until_ready(out)
    h_n = jax.block_until_ready(h_n)

    ref_out, ref_hn = _gru_reference(x, model.params, h0)
    assert out.shape == (seq_len, batch, hidden_size)
    assert h_n.shape == (n_layers, batch, hidden_size)
    assert jnp.allclose(out, ref_out, atol=1e-5, rtol=1e-5)
    assert jnp.allclose(h_n, ref_hn, atol=1e-5, rtol=1e-5)

    print("KERNEL_OK")
</pallas_src>

<mosaic_0001>
module attributes {stable_mosaic.version = 11 : i64} {
  func.func @_gru_recurrence_kernel(%arg0: i32, %arg1: i32, %arg2: memref<8x8x384xf32, #tpu.memory_space<vmem>>, %arg3: memref<128x384xf32, #tpu.memory_space<vmem>>, %arg4: memref<1x128xf32, #tpu.memory_space<vmem>>, %arg5: memref<8x128xf32, #tpu.memory_space<vmem>>, %arg6: memref<8x8x128xf32, #tpu.memory_space<vmem>>, %arg7: memref<8x128xf32, #tpu.memory_space<vmem>>, %arg8: memref<8x128xf32, #tpu.memory_space<vmem>>) attributes {dimension_semantics = [#tpu.dimension_semantics<parallel>, #tpu.dimension_semantics<arbitrary>], iteration_bounds = array<i64: 1, 1>, scalar_prefetch = 0 : i64, scratch_operands = 1 : i64, tpu.core_type = #tpu.core_type<tc>, window_params = [{transform_indices = @transform_0, window_bounds = array<i64: 8, 8, 384>}, {pipeline_mode = #tpu.pipeline_mode<synchronous>, transform_indices = @transform_1, window_bounds = array<i64: 128, 384>}, {pipeline_mode = #tpu.pipeline_mode<synchronous>, transform_indices = @transform_2, window_bounds = array<i64: 1, 128>}, {transform_indices = @transform_3, window_bounds = array<i64: 8, 128>}, {transform_indices = @transform_4, window_bounds = array<i64: 8, 8, 128>}, {transform_indices = @transform_5, window_bounds = array<i64: 8, 128>}]} {
    %c0_i32 = arith.constant 0 : i32
    %0 = arith.cmpi eq, %arg1, %c0_i32 : i32
    %1 = arith.extui %0 : i1 to i32
    %c0_i32_0 = arith.constant 0 : i32
    %2 = arith.cmpi ne, %1, %c0_i32_0 : i32
    scf.if %2 {
      %c0_80 = arith.constant 0 : index
      %c0_81 = arith.constant 0 : index
      %283 = vector.load %arg5[%c0_80, %c0_81] : memref<8x128xf32, #tpu.memory_space<vmem>>, vector<8x128xf32>
      %c0_82 = arith.constant 0 : index
      %c0_83 = arith.constant 0 : index
      %284 = vector.load %arg8[%c0_82, %c0_83] : memref<8x128xf32, #tpu.memory_space<vmem>>, vector<8x128xf32>
      tpu.vector_store %arg8[%c0_82, %c0_83], %283 {strides = array<i32>} : memref<8x128xf32, #tpu.memory_space<vmem>>, vector<8x128xf32>,
    } else {
    }
    %c0 = arith.constant 0 : index
    %c0_1 = arith.constant 0 : index
    %3 = vector.load %arg4[%c0, %c0_1] : memref<1x128xf32, #tpu.memory_space<vmem>>, vector<1x128xf32>
    %4 = vector.shape_cast %3 : vector<1x128xf32> to vector<1x128xf32>
    %5 = vector.broadcast %4 : vector<1x128xf32> to vector<8x128xf32>
    %c0_2 = arith.constant 0 : index
    %c0_3 = arith.constant 0 : index
    %6 = vector.load %arg8[%c0_2, %c0_3] : memref<8x128xf32, #tpu.memory_space<vmem>>, vector<8x128xf32>
    %c0_i32_4 = arith.constant 0 : i32
    %7 = arith.index_cast %c0_i32_4 : i32 to index
    %c0_5 = arith.constant 0 : index
    %c0_6 = arith.constant 0 : index
    %8 = vector.load %arg2[%7, %c0_5, %c0_6] : memref<8x8x384xf32, #tpu.memory_space<vmem>>, vector<1x8x384xf32>
    %9 = vector.shape_cast %8 : vector<1x8x384xf32> to vector<8x384xf32>
    %c0_7 = arith.constant 0 : index
    %c0_8 = arith.constant 0 : index
    %10 = vector.load %arg3[%c0_7, %c0_8] : memref<128x384xf32, #tpu.memory_space<vmem>>, vector<128x384xf32>
    %cst = arith.constant dense<0.000000e+00> : vector<8x384xf32>
    %11 = tpu.matmul %6, %10, %cst {dimension_numbers = #tpu.dot_dimension_numbers<[1], [0], [0], [1], [0, 0, 1, 1], [], []>} : vector<8x128xf32>, vector<128x384xf32>, vector<8x384xf32> -> vector<8x384xf32>
    %12 = vector.extract_strided_slice %9 {offsets = [0, 0], sizes = [8, 128], strides = [1, 1]} : vector<8x384xf32> to vector<8x128xf32>
    %13 = vector.extract_strided_slice %11 {offsets = [0, 0], sizes = [8, 128], strides = [1, 1]} : vector<8x384xf32> to vector<8x128xf32>
    %14 = arith.addf %12, %13 : vector<8x128xf32>
    %15 = arith.negf %14 : vector<8x128xf32>
    %16 = math.exp %15 : vector<8x128xf32>
    %cst_9 = arith.constant 1.000000e+00 : f32
    %17 = vector.broadcast %cst_9 : f32 to vector<8x128xf32>
    %18 = arith.addf %17, %16 : vector<8x128xf32>
    %19 = arith.divf %17, %18 : vector<8x128xf32>
    %20 = vector.extract_strided_slice %9 {offsets = [0, 128], sizes = [8, 128], strides = [1, 1]} : vector<8x384xf32> to vector<8x128xf32>
    %21 = vector.extract_strided_slice %11 {offsets = [0, 128], sizes = [8, 128], strides = [1, 1]} : vector<8x384xf32> to vector<8x128xf32>
    %22 = arith.addf %20, %21 : vector<8x128xf32>
    %23 = arith.negf %22 : vector<8x128xf32>
    %24 = math.exp %23 : vector<8x128xf32>
    %cst_10 = arith.constant 1.000000e+00 : f32
    %25 = vector.broadcast %cst_10 : f32 to vector<8x128xf32>
    %26 = arith.addf %25, %24 : vector<8x128xf32>
    %27 = arith.divf %25, %26 : vector<8x128xf32>
    %28 = vector.extract_strided_slice %9 {offsets = [0, 256], sizes = [8, 128], strides = [1, 1]} : vector<8x384xf32> to vector<8x128xf32>
    %29 = vector.extract_strided_slice %11 {offsets = [0, 256], sizes = [8, 128], strides = [1, 1]} : vector<8x384xf32> to vector<8x128xf32>
    %30 = arith.addf %29, %5 : vector<8x128xf32>
    %31 = arith.mulf %19, %30 : vector<8x128xf32>
    %32 = arith.addf %28, %31 : vector<8x128xf32>
    %33 = math.tanh %32 : vector<8x128xf32>
    %34 = arith.subf %6, %33 : vector<8x128xf32>
    %35 = arith.mulf %27, %34 : vector<8x128xf32>
    %36 = arith.addf %33, %35 : vector<8x128xf32>
    %37 = arith.index_cast %c0_i32_4 : i32 to index
    %c0_11 = arith.constant 0 : index
    %c0_12 = arith.constant 0 : index
    %38 = vector.load %arg6[%37, %c0_11, %c0_12] : memref<8x8x128xf32, #tpu.memory_space<vmem>>, vector<1x8x128xf32>
    %39 = vector.shape_cast %38 : vector<1x8x128xf32> to vector<8x128xf32>
    %40 = vector.shape_cast %36 : vector<8x128xf32> to vector<1x8x128xf32>
    tpu.vector_store %arg6[%37, %c0_11, %c0_12], %40 {strides = array<i32>} : memref<8x8x128xf32, #tpu.memory_space<vmem>>, vector<1x8x128xf32>,
    %c1_i32 = arith.constant 1 : i32
    %41 = arith.index_cast %c1_i32 : i32 to index
    %c0_13 = arith.constant 0 : index
    %c0_14 = arith.constant 0 : index
    %42 = vector.load %arg2[%41, %c0_13, %c0_14] : memref<8x8x384xf32, #tpu.memory_space<vmem>>, vector<1x8x384xf32>
    %43 = vector.shape_cast %42 : vector<1x8x384xf32> to vector<8x384xf32>
    %c0_15 = arith.constant 0 : index
    %c0_16 = arith.constant 0 : index
    %44 = vector.load %arg3[%c0_15, %c0_16] : memref<128x384xf32, #tpu.memory_space<vmem>>, vector<128x384xf32>
    %cst_17 = arith.constant dense<0.000000e+00> : vector<8x384xf32>
    %45 = tpu.matmul %36, %44, %cst_17 {dimension_numbers = #tpu.dot_dimension_numbers<[1], [0], [0], [1], [0, 0, 1, 1], [], []>} : vector<8x128xf32>, vector<128x384xf32>, vector<8x384xf32> -> vector<8x384xf32>
    %46 = vector.extract_strided_slice %43 {offsets = [0, 0], sizes = [8, 128], strides = [1, 1]} : vector<8x384xf32> to vector<8x128xf32>
    %47 = vector.extract_strided_slice %45 {offsets = [0, 0], sizes = [8, 128], strides = [1, 1]} : vector<8x384xf32> to vector<8x128xf32>
    %48 = arith.addf %46, %47 : vector<8x128xf32>
    %49 = arith.negf %48 : vector<8x128xf32>
    %50 = math.exp %49 : vector<8x128xf32>
    %cst_18 = arith.constant 1.000000e+00 : f32
    %51 = vector.broadcast %cst_18 : f32 to vector<8x128xf32>
    %52 = arith.addf %51, %50 : vector<8x128xf32>
    %53 = arith.divf %51, %52 : vector<8x128xf32>
    %54 = vector.extract_strided_slice %43 {offsets = [0, 128], sizes = [8, 128], strides = [1, 1]} : vector<8x384xf32> to vector<8x128xf32>
    %55 = vector.extract_strided_slice %45 {offsets = [0, 128], sizes = [8, 128], strides = [1, 1]} : vector<8x384xf32> to vector<8x128xf32>
    %56 = arith.addf %54, %55 : vector<8x128xf32>
    %57 = arith.negf %56 : vector<8x128xf32>
    %58 = math.exp %57 : vector<8x128xf32>
    %cst_19 = arith.constant 1.000000e+00 : f32
    %59 = vector.broadcast %cst_19 : f32 to vector<8x128xf32>
    %60 = arith.addf %59, %58 : vector<8x128xf32>
    %61 = arith.divf %59, %60 : vector<8x128xf32>
    %62 = vector.extract_strided_slice %43 {offsets = [0, 256], sizes = [8, 128], strides = [1, 1]} : vector<8x384xf32> to vector<8x128xf32>
    %63 = vector.extract_strided_slice %45 {offsets = [0, 256], sizes = [8, 128], strides = [1, 1]} : vector<8x384xf32> to vector<8x128xf32>
    %64 = arith.addf %63, %5 : vector<8x128xf32>
    %65 = arith.mulf %53, %64 : vector<8x128xf32>
    %66 = arith.addf %62, %65 : vector<8x128xf32>
    %67 = math.tanh %66 : vector<8x128xf32>
    %68 = arith.subf %36, %67 : vector<8x128xf32>
    %69 = arith.mulf %61, %68 : vector<8x128xf32>
    %70 = arith.addf %67, %69 : vector<8x128xf32>
    %71 = arith.index_cast %c1_i32 : i32 to index
    %c0_20 = arith.constant 0 : index
    %c0_21 = arith.constant 0 : index
    %72 = vector.load %arg6[%71, %c0_20, %c0_21] : memref<8x8x128xf32, #tpu.memory_space<vmem>>, vector<1x8x128xf32>
    %73 = vector.shape_cast %72 : vector<1x8x128xf32> to vector<8x128xf32>
    %74 = vector.shape_cast %70 : vector<8x128xf32> to vector<1x8x128xf32>
    tpu.vector_store %arg6[%71, %c0_20, %c0_21], %74 {strides = array<i32>} : memref<8x8x128xf32, #tpu.memory_space<vmem>>, vector<1x8x128xf32>,
    %c2_i32 = arith.constant 2 : i32
    %75 = arith.index_cast %c2_i32 : i32 to index
    %c0_22 = arith.constant 0 : index
    %c0_23 = arith.constant 0 : index
    %76 = vector.load %arg2[%75, %c0_22, %c0_23] : memref<8x8x384xf32, #tpu.memory_space<vmem>>, vector<1x8x384xf32>
    %77 = vector.shape_cast %76 : vector<1x8x384xf32> to vector<8x384xf32>
    %c0_24 = arith.constant 0 : index
    %c0_25 = arith.constant 0 : index
    %78 = vector.load %arg3[%c0_24, %c0_25] : memref<128x384xf32, #tpu.memory_space<vmem>>, vector<128x384xf32>
    %cst_26 = arith.constant dense<0.000000e+00> : vector<8x384xf32>
    %79 = tpu.matmul %70, %78, %cst_26 {dimension_numbers = #tpu.dot_dimension_numbers<[1], [0], [0], [1], [0, 0, 1, 1], [], []>} : vector<8x128xf32>, vector<128x384xf32>, vector<8x384xf32> -> vector<8x384xf32>
    %80 = vector.extract_strided_slice %77 {offsets = [0, 0], sizes = [8, 128], strides = [1, 1]} : vector<8x384xf32> to vector<8x128xf32>
    %81 = vector.extract_strided_slice %79 {offsets = [0, 0], sizes = [8, 128], strides = [1, 1]} : vector<8x384xf32> to vector<8x128xf32>
    %82 = arith.addf %80, %81 : vector<8x128xf32>
    %83 = arith.negf %82 : vector<8x128xf32>
    %84 = math.exp %83 : vector<8x128xf32>
    %cst_27 = arith.constant 1.000000e+00 : f32
    %85 = vector.broadcast %cst_27 : f32 to vector<8x128xf32>
    %86 = arith.addf %85, %84 : vector<8x128xf32>
    %87 = arith.divf %85, %86 : vector<8x128xf32>
    %88 = vector.extract_strided_slice %77 {offsets = [0, 128], sizes = [8, 128], strides = [1, 1]} : vector<8x384xf32> to vector<8x128xf32>
    %89 = vector.extract_strided_slice %79 {offsets = [0, 128], sizes = [8, 128], strides = [1, 1]} : vector<8x384xf32> to vector<8x128xf32>
    %90 = arith.addf %88, %89 : vector<8x128xf32>
    %91 = arith.negf %90 : vector<8x128xf32>
    %92 = math.exp %91 : vector<8x128xf32>
    %cst_28 = arith.constant 1.000000e+00 : f32
    %93 = vector.broadcast %cst_28 : f32 to vector<8x128xf32>
    %94 = arith.addf %93, %92 : vector<8x128xf32>
    %95 = arith.divf %93, %94 : vector<8x128xf32>
    %96 = vector.extract_strided_slice %77 {offsets = [0, 256], sizes = [8, 128], strides = [1, 1]} : vector<8x384xf32> to vector<8x128xf32>
    %97 = vector.extract_strided_slice %79 {offsets = [0, 256], sizes = [8, 128], strides = [1, 1]} : vector<8x384xf32> to vector<8x128xf32>
    %98 = arith.addf %97, %5 : vector<8x128xf32>
    %99 = arith.mulf %87, %98 : vector<8x128xf32>
    %100 = arith.addf %96, %99 : vector<8x128xf32>
    %101 = math.tanh %100 : vector<8x128xf32>
    %102 = arith.subf %70, %101 : vector<8x128xf32>
    %103 = arith.mulf %95, %102 : vector<8x128xf32>
    %104 = arith.addf %101, %103 : vector<8x128xf32>
    %105 = arith.index_cast %c2_i32 : i32 to index
    %c0_29 = arith.constant 0 : index
    %c0_30 = arith.constant 0 : index
    %106 = vector.load %arg6[%105, %c0_29, %c0_30] : memref<8x8x128xf32, #tpu.memory_space<vmem>>, vector<1x8x128xf32>
    %107 = vector.shape_cast %106 : vector<1x8x128xf32> to vector<8x128xf32>
    %108 = vector.shape_cast %104 : vector<8x128xf32> to vector<1x8x128xf32>
    tpu.vector_store %arg6[%105, %c0_29, %c0_30], %108 {strides = array<i32>} : memref<8x8x128xf32, #tpu.memory_space<vmem>>, vector<1x8x128xf32>,
    %c3_i32 = arith.constant 3 : i32
    %109 = arith.index_cast %c3_i32 : i32 to index
    %c0_31 = arith.constant 0 : index
    %c0_32 = arith.constant 0 : index
    %110 = vector.load %arg2[%109, %c0_31, %c0_32] : memref<8x8x384xf32, #tpu.memory_space<vmem>>, vector<1x8x384xf32>
    %111 = vector.shape_cast %110 : vector<1x8x384xf32> to vector<8x384xf32>
    %c0_33 = arith.constant 0 : index
    %c0_34 = arith.constant 0 : index
    %112 = vector.load %arg3[%c0_33, %c0_34] : memref<128x384xf32, #tpu.memory_space<vmem>>, vector<128x384xf32>
    %cst_35 = arith.constant dense<0.000000e+00> : vector<8x384xf32>
    %113 = tpu.matmul %104, %112, %cst_35 {dimension_numbers = #tpu.dot_dimension_numbers<[1], [0], [0], [1], [0, 0, 1, 1], [], []>} : vector<8x128xf32>, vector<128x384xf32>, vector<8x384xf32> -> vector<8x384xf32>
    %114 = vector.extract_strided_slice %111 {offsets = [0, 0], sizes = [8, 128], strides = [1, 1]} : vector<8x384xf32> to vector<8x128xf32>
    %115 = vector.extract_strided_slice %113 {offsets = [0, 0], sizes = [8, 128], strides = [1, 1]} : vector<8x384xf32> to vector<8x128xf32>
    %116 = arith.addf %114, %115 : vector<8x128xf32>
    %117 = arith.negf %116 : vector<8x128xf32>
    %118 = math.exp %117 : vector<8x128xf32>
    %cst_36 = arith.constant 1.000000e+00 : f32
    %119 = vector.broadcast %cst_36 : f32 to vector<8x128xf32>
    %120 = arith.addf %119, %118 : vector<8x128xf32>
    %121 = arith.divf %119, %120 : vector<8x128xf32>
    %122 = vector.extract_strided_slice %111 {offsets = [0, 128], sizes = [8, 128], strides = [1, 1]} : vector<8x384xf32> to vector<8x128xf32>
    %123 = vector.extract_strided_slice %113 {offsets = [0, 128], sizes = [8, 128], strides = [1, 1]} : vector<8x384xf32> to vector<8x128xf32>
    %124 = arith.addf %122, %123 : vector<8x128xf32>
    %125 = arith.negf %124 : vector<8x128xf32>
    %126 = math.exp %125 : vector<8x128xf32>
    %cst_37 = arith.constant 1.000000e+00 : f32
    %127 = vector.broadcast %cst_37 : f32 to vector<8x128xf32>
    %128 = arith.addf %127, %126 : vector<8x128xf32>
    %129 = arith.divf %127, %128 : vector<8x128xf32>
    %130 = vector.extract_strided_slice %111 {offsets = [0, 256], sizes = [8, 128], strides = [1, 1]} : vector<8x384xf32> to vector<8x128xf32>
    %131 = vector.extract_strided_slice %113 {offsets = [0, 256], sizes = [8, 128], strides = [1, 1]} : vector<8x384xf32> to vector<8x128xf32>
    %132 = arith.addf %131, %5 : vector<8x128xf32>
    %133 = arith.mulf %121, %132 : vector<8x128xf32>
    %134 = arith.addf %130, %133 : vector<8x128xf32>
    %135 = math.tanh %134 : vector<8x128xf32>
    %136 = arith.subf %104, %135 : vector<8x128xf32>
    %137 = arith.mulf %129, %136 : vector<8x128xf32>
    %138 = arith.addf %135, %137 : vector<8x128xf32>
    %139 = arith.index_cast %c3_i32 : i32 to index
    %c0_38 = arith.constant 0 : index
    %c0_39 = arith.constant 0 : index
    %140 = vector.load %arg6[%139, %c0_38, %c0_39] : memref<8x8x128xf32, #tpu.memory_space<vmem>>, vector<1x8x128xf32>
    %141 = vector.shape_cast %140 : vector<1x8x128xf32> to vector<8x128xf32>
    %142 = vector.shape_cast %138 : vector<8x128xf32> to vector<1x8x128xf32>
    tpu.vector_store %arg6[%139, %c0_38, %c0_39], %142 {strides = array<i32>} : memref<8x8x128xf32, #tpu.memory_space<vmem>>, vector<1x8x128xf32>,
    %c4_i32 = arith.constant 4 : i32
    %143 = arith.index_cast %c4_i32 : i32 to index
    %c0_40 = arith.constant 0 : index
    %c0_41 = arith.constant 0 : index
    %144 = vector.load %arg2[%143, %c0_40, %c0_41] : memref<8x8x384xf32, #tpu.memory_space<vmem>>, vector<1x8x384xf32>
    %145 = vector.shape_cast %144 : vector<1x8x384xf32> to vector<8x384xf32>
    %c0_42 = arith.constant 0 : index
    %c0_43 = arith.constant 0 : index
    %146 = vector.load %arg3[%c0_42, %c0_43] : memref<128x384xf32, #tpu.memory_space<vmem>>, vector<128x384xf32>
    %cst_44 = arith.constant dense<0.000000e+00> : vector<8x384xf32>
    %147 = tpu.matmul %138, %146, %cst_44 {dimension_numbers = #tpu.dot_dimension_numbers<[1], [0], [0], [1], [0, 0, 1, 1], [], []>} : vector<8x128xf32>, vector<128x384xf32>, vector<8x384xf32> -> vector<8x384xf32>
    %148 = vector.extract_strided_slice %145 {offsets = [0, 0], sizes = [8, 128], strides = [1, 1]} : vector<8x384xf32> to vector<8x128xf32>
    %149 = vector.extract_strided_slice %147 {offsets = [0, 0], sizes = [8, 128], strides = [1, 1]} : vector<8x384xf32> to vector<8x128xf32>
    %150 = arith.addf %148, %149 : vector<8x128xf32>
    %151 = arith.negf %150 : vector<8x128xf32>
    %152 = math.exp %151 : vector<8x128xf32>
    %cst_45 = arith.constant 1.000000e+00 : f32
    %153 = vector.broadcast %cst_45 : f32 to vector<8x128xf32>
    %154 = arith.addf %153, %152 : vector<8x128xf32>
    %155 = arith.divf %153, %154 : vector<8x128xf32>
    %156 = vector.extract_strided_slice %145 {offsets = [0, 128], sizes = [8, 128], strides = [1, 1]} : vector<8x384xf32> to vector<8x128xf32>
    %157 = vector.extract_strided_slice %147 {offsets = [0, 128], sizes = [8, 128], strides = [1, 1]} : vector<8x384xf32> to vector<8x128xf32>
    %158 = arith.addf %156, %157 : vector<8x128xf32>
    %159 = arith.negf %158 : vector<8x128xf32>
    %160 = math.exp %159 : vector<8x128xf32>
    %cst_46 = arith.constant 1.000000e+00 : f32
    %161 = vector.broadcast %cst_46 : f32 to vector<8x128xf32>
    %162 = arith.addf %161, %160 : vector<8x128xf32>
    %163 = arith.divf %161, %162 : vector<8x128xf32>
    %164 = vector.extract_strided_slice %145 {offsets = [0, 256], sizes = [8, 128], strides = [1, 1]} : vector<8x384xf32> to vector<8x128xf32>
    %165 = vector.extract_strided_slice %147 {offsets = [0, 256], sizes = [8, 128], strides = [1, 1]} : vector<8x384xf32> to vector<8x128xf32>
    %166 = arith.addf %165, %5 : vector<8x128xf32>
    %167 = arith.mulf %155, %166 : vector<8x128xf32>
    %168 = arith.addf %164, %167 : vector<8x128xf32>
    %169 = math.tanh %168 : vector<8x128xf32>
    %170 = arith.subf %138, %169 : vector<8x128xf32>
    %171 = arith.mulf %163, %170 : vector<8x128xf32>
    %172 = arith.addf %169, %171 : vector<8x128xf32>
    %173 = arith.index_cast %c4_i32 : i32 to index
    %c0_47 = arith.constant 0 : index
    %c0_48 = arith.constant 0 : index
    %174 = vector.load %arg6[%173, %c0_47, %c0_48] : memref<8x8x128xf32, #tpu.memory_space<vmem>>, vector<1x8x128xf32>
    %175 = vector.shape_cast %174 : vector<1x8x128xf32> to vector<8x128xf32>
    %176 = vector.shape_cast %172 : vector<8x128xf32> to vector<1x8x128xf32>
    tpu.vector_store %arg6[%173, %c0_47, %c0_48], %176 {strides = array<i32>} : memref<8x8x128xf32, #tpu.memory_space<vmem>>, vector<1x8x128xf32>,
    %c5_i32 = arith.constant 5 : i32
    %177 = arith.index_cast %c5_i32 : i32 to index
    %c0_49 = arith.constant 0 : index
    %c0_50 = arith.constant 0 : index
    %178 = vector.load %arg2[%177, %c0_49, %c0_50] : memref<8x8x384xf32, #tpu.memory_space<vmem>>, vector<1x8x384xf32>
    %179 = vector.shape_cast %178 : vector<1x8x384xf32> to vector<8x384xf32>
    %c0_51 = arith.constant 0 : index
    %c0_52 = arith.constant 0 : index
    %180 = vector.load %arg3[%c0_51, %c0_52] : memref<128x384xf32, #tpu.memory_space<vmem>>, vector<128x384xf32>
    %cst_53 = arith.constant dense<0.000000e+00> : vector<8x384xf32>
    %181 = tpu.matmul %172, %180, %cst_53 {dimension_numbers = #tpu.dot_dimension_numbers<[1], [0], [0], [1], [0, 0, 1, 1], [], []>} : vector<8x128xf32>, vector<128x384xf32>, vector<8x384xf32> -> vector<8x384xf32>
    %182 = vector.extract_strided_slice %179 {offsets = [0, 0], sizes = [8, 128], strides = [1, 1]} : vector<8x384xf32> to vector<8x128xf32>
    %183 = vector.extract_strided_slice %181 {offsets = [0, 0], sizes = [8, 128], strides = [1, 1]} : vector<8x384xf32> to vector<8x128xf32>
    %184 = arith.addf %182, %183 : vector<8x128xf32>
    %185 = arith.negf %184 : vector<8x128xf32>
    %186 = math.exp %185 : vector<8x128xf32>
    %cst_54 = arith.constant 1.000000e+00 : f32
    %187 = vector.broadcast %cst_54 : f32 to vector<8x128xf32>
    %188 = arith.addf %187, %186 : vector<8x128xf32>
    %189 = arith.divf %187, %188 : vector<8x128xf32>
    %190 = vector.extract_strided_slice %179 {offsets = [0, 128], sizes = [8, 128], strides = [1, 1]} : vector<8x384xf32> to vector<8x128xf32>
    %191 = vector.extract_strided_slice %181 {offsets = [0, 128], sizes = [8, 128], strides = [1, 1]} : vector<8x384xf32> to vector<8x128xf32>
    %192 = arith.addf %190, %191 : vector<8x128xf32>
    %193 = arith.negf %192 : vector<8x128xf32>
    %194 = math.exp %193 : vector<8x128xf32>
    %cst_55 = arith.constant 1.000000e+00 : f32
    %195 = vector.broadcast %cst_55 : f32 to vector<8x128xf32>
    %196 = arith.addf %195, %194 : vector<8x128xf32>
    %197 = arith.divf %195, %196 : vector<8x128xf32>
    %198 = vector.extract_strided_slice %179 {offsets = [0, 256], sizes = [8, 128], strides = [1, 1]} : vector<8x384xf32> to vector<8x128xf32>
    %199 = vector.extract_strided_slice %181 {offsets = [0, 256], sizes = [8, 128], strides = [1, 1]} : vector<8x384xf32> to vector<8x128xf32>
    %200 = arith.addf %199, %5 : vector<8x128xf32>
    %201 = arith.mulf %189, %200 : vector<8x128xf32>
    %202 = arith.addf %198, %201 : vector<8x128xf32>
    %203 = math.tanh %202 : vector<8x128xf32>
    %204 = arith.subf %172, %203 : vector<8x128xf32>
    %205 = arith.mulf %197, %204 : vector<8x128xf32>
    %206 = arith.addf %203, %205 : vector<8x128xf32>
    %207 = arith.index_cast %c5_i32 : i32 to index
    %c0_56 = arith.constant 0 : index
    %c0_57 = arith.constant 0 : index
    %208 = vector.load %arg6[%207, %c0_56, %c0_57] : memref<8x8x128xf32, #tpu.memory_space<vmem>>, vector<1x8x128xf32>
    %209 = vector.shape_cast %208 : vector<1x8x128xf32> to vector<8x128xf32>
    %210 = vector.shape_cast %206 : vector<8x128xf32> to vector<1x8x128xf32>
    tpu.vector_store %arg6[%207, %c0_56, %c0_57], %210 {strides = array<i32>} : memref<8x8x128xf32, #tpu.memory_space<vmem>>, vector<1x8x128xf32>,
    %c6_i32 = arith.constant 6 : i32
    %211 = arith.index_cast %c6_i32 : i32 to index
    %c0_58 = arith.constant 0 : index
    %c0_59 = arith.constant 0 : index
    %212 = vector.load %arg2[%211, %c0_58, %c0_59] : memref<8x8x384xf32, #tpu.memory_space<vmem>>, vector<1x8x384xf32>
    %213 = vector.shape_cast %212 : vector<1x8x384xf32> to vector<8x384xf32>
    %c0_60 = arith.constant 0 : index
    %c0_61 = arith.constant 0 : index
    %214 = vector.load %arg3[%c0_60, %c0_61] : memref<128x384xf32, #tpu.memory_space<vmem>>, vector<128x384xf32>
    %cst_62 = arith.constant dense<0.000000e+00> : vector<8x384xf32>
    %215 = tpu.matmul %206, %214, %cst_62 {dimension_numbers = #tpu.dot_dimension_numbers<[1], [0], [0], [1], [0, 0, 1, 1], [], []>} : vector<8x128xf32>, vector<128x384xf32>, vector<8x384xf32> -> vector<8x384xf32>
    %216 = vector.extract_strided_slice %213 {offsets = [0, 0], sizes = [8, 128], strides = [1, 1]} : vector<8x384xf32> to vector<8x128xf32>
    %217 = vector.extract_strided_slice %215 {offsets = [0, 0], sizes = [8, 128], strides = [1, 1]} : vector<8x384xf32> to vector<8x128xf32>
    %218 = arith.addf %216, %217 : vector<8x128xf32>
    %219 = arith.negf %218 : vector<8x128xf32>
    %220 = math.exp %219 : vector<8x128xf32>
    %cst_63 = arith.constant 1.000000e+00 : f32
    %221 = vector.broadcast %cst_63 : f32 to vector<8x128xf32>
    %222 = arith.addf %221, %220 : vector<8x128xf32>
    %223 = arith.divf %221, %222 : vector<8x128xf32>
    %224 = vector.extract_strided_slice %213 {offsets = [0, 128], sizes = [8, 128], strides = [1, 1]} : vector<8x384xf32> to vector<8x128xf32>
    %225 = vector.extract_strided_slice %215 {offsets = [0, 128], sizes = [8, 128], strides = [1, 1]} : vector<8x384xf32> to vector<8x128xf32>
    %226 = arith.addf %224, %225 : vector<8x128xf32>
    %227 = arith.negf %226 : vector<8x128xf32>
    %228 = math.exp %227 : vector<8x128xf32>
    %cst_64 = arith.constant 1.000000e+00 : f32
    %229 = vector.broadcast %cst_64 : f32 to vector<8x128xf32>
    %230 = arith.addf %229, %228 : vector<8x128xf32>
    %231 = arith.divf %229, %230 : vector<8x128xf32>
    %232 = vector.extract_strided_slice %213 {offsets = [0, 256], sizes = [8, 128], strides = [1, 1]} : vector<8x384xf32> to vector<8x128xf32>
    %233 = vector.extract_strided_slice %215 {offsets = [0, 256], sizes = [8, 128], strides = [1, 1]} : vector<8x384xf32> to vector<8x128xf32>
    %234 = arith.addf %233, %5 : vector<8x128xf32>
    %235 = arith.mulf %223, %234 : vector<8x128xf32>
    %236 = arith.addf %232, %235 : vector<8x128xf32>
    %237 = math.tanh %236 : vector<8x128xf32>
    %238 = arith.subf %206, %237 : vector<8x128xf32>
    %239 = arith.mulf %231, %238 : vector<8x128xf32>
    %240 = arith.addf %237, %239 : vector<8x128xf32>
    %241 = arith.index_cast %c6_i32 : i32 to index
    %c0_65 = arith.constant 0 : index
    %c0_66 = arith.constant 0 : index
    %242 = vector.load %arg6[%241, %c0_65, %c0_66] : memref<8x8x128xf32, #tpu.memory_space<vmem>>, vector<1x8x128xf32>
    %243 = vector.shape_cast %242 : vector<1x8x128xf32> to vector<8x128xf32>
    %244 = vector.shape_cast %240 : vector<8x128xf32> to vector<1x8x128xf32>
    tpu.vector_store %arg6[%241, %c0_65, %c0_66], %244 {strides = array<i32>} : memref<8x8x128xf32, #tpu.memory_space<vmem>>, vector<1x8x128xf32>,
    %c7_i32 = arith.constant 7 : i32
    %245 = arith.index_cast %c7_i32 : i32 to index
    %c0_67 = arith.constant 0 : index
    %c0_68 = arith.constant 0 : index
    %246 = vector.load %arg2[%245, %c0_67, %c0_68] : memref<8x8x384xf32, #tpu.memory_space<vmem>>, vector<1x8x384xf32>
    %247 = vector.shape_cast %246 : vector<1x8x384xf32> to vector<8x384xf32>
    %c0_69 = arith.constant 0 : index
    %c0_70 = arith.constant 0 : index
    %248 = vector.load %arg3[%c0_69, %c0_70] : memref<128x384xf32, #tpu.memory_space<vmem>>, vector<128x384xf32>
    %cst_71 = arith.constant dense<0.000000e+00> : vector<8x384xf32>
    %249 = tpu.matmul %240, %248, %cst_71 {dimension_numbers = #tpu.dot_dimension_numbers<[1], [0], [0], [1], [0, 0, 1, 1], [], []>} : vector<8x128xf32>, vector<128x384xf32>, vector<8x384xf32> -> vector<8x384xf32>
    %250 = vector.extract_strided_slice %247 {offsets = [0, 0], sizes = [8, 128], strides = [1, 1]} : vector<8x384xf32> to vector<8x128xf32>
    %251 = vector.extract_strided_slice %249 {offsets = [0, 0], sizes = [8, 128], strides = [1, 1]} : vector<8x384xf32> to vector<8x128xf32>
    %252 = arith.addf %250, %251 : vector<8x128xf32>
    %253 = arith.negf %252 : vector<8x128xf32>
    %254 = math.exp %253 : vector<8x128xf32>
    %cst_72 = arith.constant 1.000000e+00 : f32
    %255 = vector.broadcast %cst_72 : f32 to vector<8x128xf32>
    %256 = arith.addf %255, %254 : vector<8x128xf32>
    %257 = arith.divf %255, %256 : vector<8x128xf32>
    %258 = vector.extract_strided_slice %247 {offsets = [0, 128], sizes = [8, 128], strides = [1, 1]} : vector<8x384xf32> to vector<8x128xf32>
    %259 = vector.extract_strided_slice %249 {offsets = [0, 128], sizes = [8, 128], strides = [1, 1]} : vector<8x384xf32> to vector<8x128xf32>
    %260 = arith.addf %258, %259 : vector<8x128xf32>
    %261 = arith.negf %260 : vector<8x128xf32>
    %262 = math.exp %261 : vector<8x128xf32>
    %cst_73 = arith.constant 1.000000e+00 : f32
    %263 = vector.broadcast %cst_73 : f32 to vector<8x128xf32>
    %264 = arith.addf %263, %262 : vector<8x128xf32>
    %265 = arith.divf %263, %264 : vector<8x128xf32>
    %266 = vector.extract_strided_slice %247 {offsets = [0, 256], sizes = [8, 128], strides = [1, 1]} : vector<8x384xf32> to vector<8x128xf32>
    %267 = vector.extract_strided_slice %249 {offsets = [0, 256], sizes = [8, 128], strides = [1, 1]} : vector<8x384xf32> to vector<8x128xf32>
    %268 = arith.addf %267, %5 : vector<8x128xf32>
    %269 = arith.mulf %257, %268 : vector<8x128xf32>
    %270 = arith.addf %266, %269 : vector<8x128xf32>
    %271 = math.tanh %270 : vector<8x128xf32>
    %272 = arith.subf %240, %271 : vector<8x128xf32>
    %273 = arith.mulf %265, %272 : vector<8x128xf32>
    %274 = arith.addf %271, %273 : vector<8x128xf32>
    %275 = arith.index_cast %c7_i32 : i32 to index
    %c0_74 = arith.constant 0 : index
    %c0_75 = arith.constant 0 : index
    %276 = vector.load %arg6[%275, %c0_74, %c0_75] : memref<8x8x128xf32, #tpu.memory_space<vmem>>, vector<1x8x128xf32>
    %277 = vector.shape_cast %276 : vector<1x8x128xf32> to vector<8x128xf32>
    %278 = vector.shape_cast %274 : vector<8x128xf32> to vector<1x8x128xf32>
    tpu.vector_store %arg6[%275, %c0_74, %c0_75], %278 {strides = array<i32>} : memref<8x8x128xf32, #tpu.memory_space<vmem>>, vector<1x8x128xf32>,
    %c8_i32 = arith.constant 8 : i32
    %c0_76 = arith.constant 0 : index
    %c0_77 = arith.constant 0 : index
    %279 = vector.load %arg8[%c0_76, %c0_77] : memref<8x128xf32, #tpu.memory_space<vmem>>, vector<8x128xf32>
    tpu.vector_store %arg8[%c0_76, %c0_77], %274 {strides = array<i32>} : memref<8x128xf32, #tpu.memory_space<vmem>>, vector<8x128xf32>,
    %c0_i32_78 = arith.constant 0 : i32
    %280 = arith.cmpi eq, %arg1, %c0_i32_78 : i32
    %281 = arith.extui %280 : i1 to i32
    %c0_i32_79 = arith.constant 0 : i32
    %282 = arith.cmpi ne, %281, %c0_i32_79 : i32
    scf.if %282 {
      %c0_80 = arith.constant 0 : index
      %c0_81 = arith.constant 0 : index
      %283 = vector.load %arg7[%c0_80, %c0_81] : memref<8x128xf32, #tpu.memory_space<vmem>>, vector<8x128xf32>
      tpu.vector_store %arg7[%c0_80, %c0_81], %274 {strides = array<i32>} : memref<8x128xf32, #tpu.memory_space<vmem>>, vector<8x128xf32>,
    } else {
    }
    return
  }
  func.func @transform_0(%arg0: i32, %arg1: i32) -> (i32, i32, i32) {
    %c0_i32 = arith.constant 0 : i32
    %c0_i32_0 = arith.constant 0 : i32
    return %arg1, %arg0, %c0_i32 : i32, i32, i32
  }
  func.func @transform_1(%arg0: i32, %arg1: i32) -> (i32, i32) {
    %c0_i32 = arith.constant 0 : i32
    %c0_i32_0 = arith.constant 0 : i32
    %c0_i32_1 = arith.constant 0 : i32
    return %c0_i32, %c0_i32_0 : i32, i32
  }
  func.func @transform_2(%arg0: i32, %arg1: i32) -> (i32, i32) {
    %c0_i32 = arith.constant 0 : i32
    %c0_i32_0 = arith.constant 0 : i32
    %c0_i32_1 = arith.constant 0 : i32
    return %c0_i32, %c0_i32_0 : i32, i32
  }
  func.func @transform_3(%arg0: i32, %arg1: i32) -> (i32, i32) {
    %c0_i32 = arith.constant 0 : i32
    %c0_i32_0 = arith.constant 0 : i32
    return %arg0, %c0_i32 : i32, i32
  }
  func.func @transform_4(%arg0: i32, %arg1: i32) -> (i32, i32, i32) {
    %c0_i32 = arith.constant 0 : i32
    %c0_i32_0 = arith.constant 0 : i32
    return %arg1, %arg0, %c0_i32 : i32, i32, i32
  }
  func.func @transform_5(%arg0: i32, %arg1: i32) -> (i32, i32) {
    %c0_i32 = arith.constant 0 : i32
    %c0_i32_0 = arith.constant 0 : i32
    return %arg0, %c0_i32 : i32, i32
  }
}

</mosaic_0001>

<llo_original>
// kernel: base_rnn_forward.2
$region0: #{base_rnn_forward.2}
  #allocation0 [shape = 'u32[]', space=smem, size = 0x4, offset = 0x4, fixed_abs, tag = 'smem constant byte address 0x4 - core index']
  #allocation1 [shape = 'u32[144,128]{1,0:T(1,128)}', space=vmem, size = 0x12000, scoped, tag = 'internal scratch']
  #allocation2 [shape = 'f32[8,128]{1,0:T(8,128)}', space=vmem, size = 0x1000, scoped, tag = 'scratch operand']
  %s0 = inlined_call_operand.vmem [shape: f32[8,8,384], index: 0, kind: input, shape index: {}]
  %s1 = inlined_call_operand.vmem [shape: f32[128,384], index: 1, kind: input, shape index: {}]
  %s2 = inlined_call_operand.vmem [shape: f32[1,128], index: 2, kind: input, shape index: {}]
  %s3 = inlined_call_operand.vmem [shape: f32[8,128], index: 3, kind: input, shape index: {}]
  %s4 = inlined_call_operand.vmem [shape: f32[8,8,128], index: 4, kind: output, shape index: {0}]
  %s5 = inlined_call_operand.vmem [shape: f32[8,128], index: 5, kind: output, shape index: {1}]
  %6 = xla_tuple %s4, %s5
  %s7 = sld [smem:[#allocation0]]
  $region42: #{base_rnn_forward.2} parent=0
    _
  %s9 = ssub.s32 1, %s7
  %s10 = scalar_select 0, %s9, %s7
  // Predicated region
  $region2: #{base_rnn_forward.2} parent=0 // pred_check
    _
  $region3: #{base_rnn_forward.2} parent=0 // pred_check_branch
    %12 = sbr.rel (0) target = $region5
  $region4: #{base_rnn_forward.2} parent=0 // pred_region
    _
  $region5: #{base_rnn_forward.2} parent=0 // pred_fallthru
    _
  // Predicated region
  $region6: #{base_rnn_forward.2} parent=0 // pred_check
    _
  $region7: #{base_rnn_forward.2} parent=0 // pred_check_branch
    %14 = sbr.rel (0) target = $region9
  $region8: #{base_rnn_forward.2} parent=0 // pred_region
    _
  $region9: #{base_rnn_forward.2} parent=0 // pred_fallthru
    _
  // Predicated region
  $region10: #{base_rnn_forward.2} parent=0 // pred_check
    _
  $region11: #{base_rnn_forward.2} parent=0 // pred_check_branch
    %16 = sbr.rel (0) target = $region13
  $region12: #{base_rnn_forward.2} parent=0 // pred_region
    _
  $region13: #{base_rnn_forward.2} parent=0 // pred_fallthru
    _
  // Predicated region
  $region14: #{base_rnn_forward.2} parent=0 // pred_check
    _
  $region15: #{base_rnn_forward.2} parent=0 // pred_check_branch
    %18 = sbr.rel (0) target = $region17
  $region16: #{base_rnn_forward.2} parent=0 // pred_region
    _
  $region17: #{base_rnn_forward.2} parent=0 // pred_fallthru
    _
  %p19 = scmp.eq.s32.totalorder 0, 0
  // Predicated region
  $region18: #{base_rnn_forward.2} parent=0 // pred_check
    %p20 = pneg %p19
  $region19: #{base_rnn_forward.2} parent=0 // pred_check_branch
    %22 = sbr.rel (%p20) target = $region21
  $region20: #{base_rnn_forward.2} parent=0 // pred_region
    %v23 = vld [vmem:[%s3] sm:$0xff]
    %24 = vst [vmem:[#allocation2] sm:$0xff] %v23
  $region21: #{base_rnn_forward.2} parent=0 // pred_fallthru
    _
  %v25 = vld [vmem:[%s2] sm:$0x1]
  %v27 = vlaneseq
  %v28 = vshrl.u32 %v27, 7
  %v29 = vsub.s32 0, %v28
  %v30 = vrot.slane %v25, %v29
  %v32 = vld [vmem:[#allocation2] sm:$0xff]
  %v33 = vld [vmem:[%s0] sm:$0xff]
  %v34 = vld [vmem:[%s0 + $0x8] sm:$0xff]
  %v35 = vld [vmem:[%s0 + $0x10] sm:$0xff]
  %v36 = vld [vmem:[%s1] sm:$0xff]
  %v37 = vld [vmem:[%s1 + $0x8] sm:$0xff]
  %v38 = vld [vmem:[%s1 + $0x10] sm:$0xff]
  %v39 = vld [vmem:[%s1 + $0x18] sm:$0xff]
  %v40 = vld [vmem:[%s1 + $0x20] sm:$0xff]
  %v41 = vld [vmem:[%s1 + $0x28] sm:$0xff]
  %v42 = vld [vmem:[%s1 + $0x30] sm:$0xff]
  %v43 = vld [vmem:[%s1 + $0x38] sm:$0xff]
  %v44 = vld [vmem:[%s1 + $0x40] sm:$0xff]
  %v45 = vld [vmem:[%s1 + $0x48] sm:$0xff]
  %v46 = vld [vmem:[%s1 + $0x50] sm:$0xff]
  %v47 = vld [vmem:[%s1 + $0x58] sm:$0xff]
  %v48 = vld [vmem:[%s1 + $0x60] sm:$0xff]
  %v49 = vld [vmem:[%s1 + $0x68] sm:$0xff]
  %v50 = vld [vmem:[%s1 + $0x70] sm:$0xff]
  %v51 = vld [vmem:[%s1 + $0x78] sm:$0xff]
  %v52 = vld [vmem:[%s1 + $0x80] sm:$0xff]
  %v53 = vld [vmem:[%s1 + $0x88] sm:$0xff]
  %v54 = vld [vmem:[%s1 + $0x90] sm:$0xff]
  %v55 = vld [vmem:[%s1 + $0x98] sm:$0xff]
  %v56 = vld [vmem:[%s1 + $0xa0] sm:$0xff]
  %v57 = vld [vmem:[%s1 + $0xa8] sm:$0xff]
  %v58 = vld [vmem:[%s1 + $0xb0] sm:$0xff]
  %v59 = vld [vmem:[%s1 + $0xb8] sm:$0xff]
  %v60 = vld [vmem:[%s1 + $0xc0] sm:$0xff]
  %v61 = vld [vmem:[%s1 + $0xc8] sm:$0xff]
  %v62 = vld [vmem:[%s1 + $0xd0] sm:$0xff]
  %v63 = vld [vmem:[%s1 + $0xd8] sm:$0xff]
  %v64 = vld [vmem:[%s1 + $0xe0] sm:$0xff]
  %v65 = vld [vmem:[%s1 + $0xe8] sm:$0xff]
  %v66 = vld [vmem:[%s1 + $0xf0] sm:$0xff]
  %v67 = vld [vmem:[%s1 + $0xf8] sm:$0xff]
  %v68 = vld [vmem:[%s1 + $0x100] sm:$0xff]
  %v69 = vld [vmem:[%s1 + $0x108] sm:$0xff]
  %v70 = vld [vmem:[%s1 + $0x110] sm:$0xff]
  %v71 = vld [vmem:[%s1 + $0x118] sm:$0xff]
  %v72 = vld [vmem:[%s1 + $0x120] sm:$0xff]
  %v73 = vld [vmem:[%s1 + $0x128] sm:$0xff]
  %v74 = vld [vmem:[%s1 + $0x130] sm:$0xff]
  %v75 = vld [vmem:[%s1 + $0x138] sm:$0xff]
  %v76 = vld [vmem:[%s1 + $0x140] sm:$0xff]
  %v77 = vld [vmem:[%s1 + $0x148] sm:$0xff]
  %v78 = vld [vmem:[%s1 + $0x150] sm:$0xff]
  %v79 = vld [vmem:[%s1 + $0x158] sm:$0xff]
  %v80 = vld [vmem:[%s1 + $0x160] sm:$0xff]
  %v81 = vld [vmem:[%s1 + $0x168] sm:$0xff]
  %v82 = vld [vmem:[%s1 + $0x170] sm:$0xff]
  %v83 = vld [vmem:[%s1 + $0x178] sm:$0xff]
  %84 = vmatprep.subr.mxu0 %v37
  %85 = vmatpush1.msra.mxu0 %v36
  %86 = vmatprep.subr.mxu0 %v40
  %87 = vmatpush1.msra.mxu0 %v39
  %88 = vmatprep.subr.mxu0 %v43
  %89 = vmatpush1.msra.mxu0 %v42
  %90 = vmatprep.subr.mxu0 %v46
  %91 = vmatpush1.msra.mxu0 %v45
  %92 = vmatprep.subr.mxu0 %v49
  %93 = vmatpush1.msra.mxu0 %v48
  %94 = vmatprep.subr.mxu0 %v52
  %95 = vmatpush1.msra.mxu0 %v51
  %96 = vmatprep.subr.mxu0 %v55
  %97 = vmatpush1.msra.mxu0 %v54
  %98 = vmatprep.subr.mxu0 %v58
  %99 = vmatpush1.msra.mxu0 %v57
  %100 = vmatprep.subr.mxu0 %v61
  %101 = vmatpush1.msra.mxu0 %v60
  %102 = vmatprep.subr.mxu0 %v64
  %103 = vmatpush1.msra.mxu0 %v63
  %104 = vmatprep.subr.mxu0 %v67
  %105 = vmatpush1.msra.mxu0 %v66
  %106 = vmatprep.subr.mxu0 %v70
  %107 = vmatpush1.msra.mxu0 %v69
  %108 = vmatprep.subr.mxu0 %v73
  %109 = vmatpush1.msra.mxu0 %v72
  %110 = vmatprep.subr.mxu0 %v76
  %111 = vmatpush1.msra.mxu0 %v75
  %112 = vmatprep.subr.mxu0 %v79
  %113 = vmatpush1.msra.mxu0 %v78
  %114 = vmatprep.subr.mxu0 %v82
  %115 = vmatpush1.msra.mxu0 %v81
  %116 = vmatprep.subr.mxu0 0.0
  %117 = vmatpush1.msra.mxu0 0.0
  %118 = vmatprep.subr.mxu0 0.0
  %119 = vmatpush1.msra.mxu0 0.0
  %120 = vmatprep.subr.mxu0 0.0
  %121 = vmatpush1.msra.mxu0 0.0
  %122 = vmatprep.subr.mxu0 0.0
  %123 = vmatpush1.msra.mxu0 0.0
  %124 = vmatprep.subr.mxu0 0.0
  %125 = vmatpush1.msra.mxu0 0.0
  %126 = vmatprep.subr.mxu0 0.0
  %127 = vmatpush1.msra.mxu0 0.0
  %128 = vmatprep.subr.mxu0 0.0
  %129 = vmatpush1.msra.mxu0 0.0
  %130 = vmatprep.subr.mxu0 0.0
  %131 = vmatpush1.msra.mxu0 0.0
  %132 = vmatprep.subr.mxu0 0.0
  %133 = vmatpush1.msra.mxu0 0.0
  %134 = vmatprep.subr.mxu0 0.0
  %135 = vmatpush1.msra.mxu0 0.0
  %136 = vmatprep.subr.mxu0 0.0
  %137 = vmatpush1.msra.mxu0 0.0
  %138 = vmatprep.subr.mxu0 0.0
  %139 = vmatpush1.msra.mxu0 0.0
  %140 = vmatprep.subr.mxu0 0.0
  %141 = vmatpush1.msra.mxu0 0.0
  %142 = vmatprep.subr.mxu0 0.0
  %143 = vmatpush1.msra.mxu0 0.0
  %144 = vmatprep.subr.mxu0 0.0
  %145 = vmatpush1.msra.mxu0 0.0
  %146 = vmatprep.subr.mxu0 0.0
  %147 = vmatpush1.msra.mxu0 0.0
  %148 = vmatprep.mubr.f32.mxu0 0.0
  %149 = vmatmul.mubr.f32.gmra.mrb[0].mxu0 %v32
  %v150 = vpop.f32.mrb[0].mxu0
  %v151 = vadd.f32 0.0, %v150
  %v152 = vpop.f32.mrb[0].mxu0
  %v153 = vadd.f32 0.0, %v152
  %154 = vdwg.mxu0
  %155 = vmatprep.subr.mxu0 0.0
  %156 = vmatpush1.msra.mxu0 %v38
  %157 = vmatprep.subr.mxu0 0.0
  %158 = vmatpush1.msra.mxu0 %v41
  %159 = vmatprep.subr.mxu0 0.0
  %160 = vmatpush1.msra.mxu0 %v44
  %161 = vmatprep.subr.mxu0 0.0
  %162 = vmatpush1.msra.mxu0 %v47
  %163 = vmatprep.subr.mxu0 0.0
  %164 = vmatpush1.msra.mxu0 %v50
  %165 = vmatprep.subr.mxu0 0.0
  %166 = vmatpush1.msra.mxu0 %v53
  %167 = vmatprep.subr.mxu0 0.0
  %168 = vmatpush1.msra.mxu0 %v56
  %169 = vmatprep.subr.mxu0 0.0
  %170 = vmatpush1.msra.mxu0 %v59
  %171 = vmatprep.subr.mxu0 0.0
  %172 = vmatpush1.msra.mxu0 %v62
  %173 = vmatprep.subr.mxu0 0.0
  %174 = vmatpush1.msra.mxu0 %v65
  %175 = vmatprep.subr.mxu0 0.0
  %176 = vmatpush1.msra.mxu0 %v68
  %177 = vmatprep.subr.mxu0 0.0
  %178 = vmatpush1.msra.mxu0 %v71
  %179 = vmatprep.subr.mxu0 0.0
  %180 = vmatpush1.msra.mxu0 %v74
  %181 = vmatprep.subr.mxu0 0.0
  %182 = vmatpush1.msra.mxu0 %v77
  %183 = vmatprep.subr.mxu0 0.0
  %184 = vmatpush1.msra.mxu0 %v80
  %185 = vmatprep.subr.mxu0 0.0
  %186 = vmatpush1.msra.mxu0 %v83
  %187 = vmatprep.subr.mxu0 0.0
  %188 = vmatpush1.msra.mxu0 0.0
  %189 = vmatprep.subr.mxu0 0.0
  %190 = vmatpush1.msra.mxu0 0.0
  %191 = vmatprep.subr.mxu0 0.0
  %192 = vmatpush1.msra.mxu0 0.0
  %193 = vmatprep.subr.mxu0 0.0
  %194 = vmatpush1.msra.mxu0 0.0
  %195 = vmatprep.subr.mxu0 0.0
  %196 = vmatpush1.msra.mxu0 0.0
  %197 = vmatprep.subr.mxu0 0.0
  %198 = vmatpush1.msra.mxu0 0.0
  %199 = vmatprep.subr.mxu0 0.0
  %200 = vmatpush1.msra.mxu0 0.0
  %201 = vmatprep.subr.mxu0 0.0
  %202 = vmatpush1.msra.mxu0 0.0
  %203 = vmatprep.subr.mxu0 0.0
  %204 = vmatpush1.msra.mxu0 0.0
  %205 = vmatprep.subr.mxu0 0.0
  %206 = vmatpush1.msra.mxu0 0.0
  %207 = vmatprep.subr.mxu0 0.0
  %208 = vmatpush1.msra.mxu0 0.0
  %209 = vmatprep.subr.mxu0 0.0
  %210 = vmatpush1.msra.mxu0 0.0
  %211 = vmatprep.subr.mxu0 0.0
  %212 = vmatpush1.msra.mxu0 0.0
  %213 = vmatprep.subr.mxu0 0.0
  %214 = vmatpush1.msra.mxu0 0.0
  %215 = vmatprep.subr.mxu0 0.0
  %216 = vmatpush1.msra.mxu0 0.0
  %217 = vmatprep.subr.mxu0 0.0
  %218 = vmatpush1.msra.mxu0 0.0
  %219 = vmatprep.mubr.f32.mxu0 0.0
  %220 = vmatmul.mubr.f32.gmra.mrb[0].mxu0 %v32
  %v221 = vpop.f32.mrb[0].mxu0
  %v222 = vadd.f32 0.0, %v221
  %v223 = vpop.f32.mrb[0].mxu0
  %224 = vdwg.mxu0
  %v225 = vadd.f32 %v33, %v151
  %v226 = vxor.u32 %v225, 2147483648
  %v227 = vmul.f32 %v226, 1.442695
  %v228 = vpow.pop %v227
  %v229 = vadd.f32 %v228, 1.0
  %v230 = vrcp.pop %v229
  %v231 = vmul.f32 1.0, %v230
  %v232 = vadd.f32 %v34, %v153
  %v233 = vxor.u32 %v232, 2147483648
  %v234 = vmul.f32 %v233, 1.442695
  %v235 = vpow.pop %v234
  %v236 = vadd.f32 %v235, 1.0
  %v237 = vrcp.pop %v236
  %v238 = vmul.f32 1.0, %v237
  %v239 = vadd.f32 %v222, %v30
  %v240 = vmul.f32 %v231, %v239
  %v241 = vadd.f32 %v35, %v240
  %v242 = vtanh.pop %v241
  %v243 = vsub.f32 %v32, %v242
  %v244 = vmul.f32 %v238, %v243
  %v245 = vadd.f32 %v242, %v244
  %246 = vst [vmem:[%s4] sm:$0xff] %v245
  %s247 = scalar_lea.vmem %s0, 24
  %v248 = vld [vmem:[%s247] sm:$0xff]
  %v249 = vld [vmem:[%s247 + $0x8] sm:$0xff]
  %v250 = vld [vmem:[%s247 + $0x10] sm:$0xff]
  %v251 = vld [vmem:[%s1] sm:$0xff]
  %v252 = vld [vmem:[%s1 + $0x8] sm:$0xff]
  %v253 = vld [vmem:[%s1 + $0x10] sm:$0xff]
  %v254 = vld [vmem:[%s1 + $0x18] sm:$0xff]
  %v255 = vld [vmem:[%s1 + $0x20] sm:$0xff]
  %v256 = vld [vmem:[%s1 + $0x28] sm:$0xff]
  %v257 = vld [vmem:[%s1 + $0x30] sm:$0xff]
  %v258 = vld [vmem:[%s1 + $0x38] sm:$0xff]
  %v259 = vld [vmem:[%s1 + $0x40] sm:$0xff]
  %v260 = vld [vmem:[%s1 + $0x48] sm:$0xff]
  %v261 = vld [vmem:[%s1 + $0x50] sm:$0xff]
  %v262 = vld [vmem:[%s1 + $0x58] sm:$0xff]
  %v263 = vld [vmem:[%s1 + $0x60] sm:$0xff]
  %v264 = vld [vmem:[%s1 + $0x68] sm:$0xff]
  %v265 = vld [vmem:[%s1 + $0x70] sm:$0xff]
  %v266 = vld [vmem:[%s1 + $0x78] sm:$0xff]
  %v267 = vld [vmem:[%s1 + $0x80] sm:$0xff]
  %v268 = vld [vmem:[%s1 + $0x88] sm:$0xff]
  %v269 = vld [vmem:[%s1 + $0x90] sm:$0xff]
  %v270 = vld [vmem:[%s1 + $0x98] sm:$0xff]
  %v271 = vld [vmem:[%s1 + $0xa0] sm:$0xff]
  %v272 = vld [vmem:[%s1 + $0xa8] sm:$0xff]
  %v273 = vld [vmem:[%s1 + $0xb0] sm:$0xff]
  %v274 = vld [vmem:[%s1 + $0xb8] sm:$0xff]
  %v275 = vld [vmem:[%s1 + $0xc0] sm:$0xff]
  %v276 = vld [vmem:[%s1 + $0xc8] sm:$0xff]
  %v277 = vld [vmem:[%s1 + $0xd0] sm:$0xff]
  %v278 = vld [vmem:[%s1 + $0xd8] sm:$0xff]
  %v279 = vld [vmem:[%s1 + $0xe0] sm:$0xff]
  %v280 = vld [vmem:[%s1 + $0xe8] sm:$0xff]
  %v281 = vld [vmem:[%s1 + $0xf0] sm:$0xff]
  %v282 = vld [vmem:[%s1 + $0xf8] sm:$0xff]
  %v283 = vld [vmem:[%s1 + $0x100] sm:$0xff]
  %v284 = vld [vmem:[%s1 + $0x108] sm:$0xff]
  %v285 = vld [vmem:[%s1 + $0x110] sm:$0xff]
  %v286 = vld [vmem:[%s1 + $0x118] sm:$0xff]
  %v287 = vld [vmem:[%s1 + $0x120] sm:$0xff]
  %v288 = vld [vmem:[%s1 + $0x128] sm:$0xff]
  %v289 = vld [vmem:[%s1 + $0x130] sm:$0xff]
  %v290 = vld [vmem:[%s1 + $0x138] sm:$0xff]
  %v291 = vld [vmem:[%s1 + $0x140] sm:$0xff]
  %v292 = vld [vmem:[%s1 + $0x148] sm:$0xff]
  %v293 = vld [vmem:[%s1 + $0x150] sm:$0xff]
  %v294 = vld [vmem:[%s1 + $0x158] sm:$0xff]
  %v295 = vld [vmem:[%s1 + $0x160] sm:$0xff]
  %v296 = vld [vmem:[%s1 + $0x168] sm:$0xff]
  %v297 = vld [vmem:[%s1 + $0x170] sm:$0xff]
  %v298 = vld [vmem:[%s1 + $0x178] sm:$0xff]
  %299 = vmatprep.subr.mxu0 %v252
  %300 = vmatpush1.msra.mxu0 %v251
  %301 = vmatprep.subr.mxu0 %v255
  %302 = vmatpush1.msra.mxu0 %v254
  %303 = vmatprep.subr.mxu0 %v258
  %304 = vmatpush1.msra.mxu0 %v257
  %305 = vmatprep.subr.mxu0 %v261
  %306 = vmatpush1.msra.mxu0 %v260
  %307 = vmatprep.subr.mxu0 %v264
  %308 = vmatpush1.msra.mxu0 %v263
  %309 = vmatprep.subr.mxu0 %v267
  %310 = vmatpush1.msra.mxu0 %v266
  %311 = vmatprep.subr.mxu0 %v270
  %312 = vmatpush1.msra.mxu0 %v269
  %313 = vmatprep.subr.mxu0 %v273
  %314 = vmatpush1.msra.mxu0 %v272
  %315 = vmatprep.subr.mxu0 %v276
  %316 = vmatpush1.msra.mxu0 %v275
  %317 = vmatprep.subr.mxu0 %v279
  %318 = vmatpush1.msra.mxu0 %v278
  %319 = vmatprep.subr.mxu0 %v282
  %320 = vmatpush1.msra.mxu0 %v281
  %321 = vmatprep.subr.mxu0 %v285
  %322 = vmatpush1.msra.mxu0 %v284
  %323 = vmatprep.subr.mxu0 %v288
  %324 = vmatpush1.msra.mxu0 %v287
  %325 = vmatprep.subr.mxu0 %v291
  %326 = vmatpush1.msra.mxu0 %v290
  %327 = vmatprep.subr.mxu0 %v294
  %328 = vmatpush1.msra.mxu0 %v293
  %329 = vmatprep.subr.mxu0 %v297
  %330 = vmatpush1.msra.mxu0 %v296
  %331 = vmatprep.subr.mxu0 0.0
  %332 = vmatpush1.msra.mxu0 0.0
  %333 = vmatprep.subr.mxu0 0.0
  %334 = vmatpush1.msra.mxu0 0.0
  %335 = vmatprep.subr.mxu0 0.0
  %336 = vmatpush1.msra.mxu0 0.0
  %337 = vmatprep.subr.mxu0 0.0
  %338 = vmatpush1.msra.mxu0 0.0
  %339 = vmatprep.subr.mxu0 0.0
  %340 = vmatpush1.msra.mxu0 0.0
  %341 = vmatprep.subr.mxu0 0.0
  %342 = vmatpush1.msra.mxu0 0.0
  %343 = vmatprep.subr.mxu0 0.0
  %344 = vmatpush1.msra.mxu0 0.0
  %345 = vmatprep.subr.mxu0 0.0
  %346 = vmatpush1.msra.mxu0 0.0
  %347 = vmatprep.subr.mxu0 0.0
  %348 = vmatpush1.msra.mxu0 0.0
  %349 = vmatprep.subr.mxu0 0.0
  %350 = vmatpush1.msra.mxu0 0.0
  %351 = vmatprep.subr.mxu0 0.0
  %352 = vmatpush1.msra.mxu0 0.0
  %353 = vmatprep.subr.mxu0 0.0
  %354 = vmatpush1.msra.mxu0 0.0
  %355 = vmatprep.subr.mxu0 0.0
  %356 = vmatpush1.msra.mxu0 0.0
  %357 = vmatprep.subr.mxu0 0.0
  %358 = vmatpush1.msra.mxu0 0.0
  %359 = vmatprep.subr.mxu0 0.0
  %360 = vmatpush1.msra.mxu0 0.0
  %361 = vmatprep.subr.mxu0 0.0
  %362 = vmatpush1.msra.mxu0 0.0
  %363 = vmatprep.mubr.f32.mxu0 0.0
  %364 = vmatmul.mubr.f32.gmra.mrb[0].mxu0 %v245
  %v365 = vpop.f32.mrb[0].mxu0
  %v366 = vadd.f32 0.0, %v365
  %v367 = vpop.f32.mrb[0].mxu0
  %v368 = vadd.f32 0.0, %v367
  %369 = vdwg.mxu0
  %370 = vmatprep.subr.mxu0 0.0
  %371 = vmatpush1.msra.mxu0 %v253
  %372 = vmatprep.subr.mxu0 0.0
  %373 = vmatpush1.msra.mxu0 %v256
  %374 = vmatprep.subr.mxu0 0.0
  %375 = vmatpush1.msra.mxu0 %v259
  %376 = vmatprep.subr.mxu0 0.0
  %377 = vmatpush1.msra.mxu0 %v262
  %378 = vmatprep.subr.mxu0 0.0
  %379 = vmatpush1.msra.mxu0 %v265
  %380 = vmatprep.subr.mxu0 0.0
  %381 = vmatpush1.msra.mxu0 %v268
  %382 = vmatprep.subr.mxu0 0.0
  %383 = vmatpush1.msra.mxu0 %v271
  %384 = vmatprep.subr.mxu0 0.0
  %385 = vmatpush1.msra.mxu0 %v274
  %386 = vmatprep.subr.mxu0 0.0
  %387 = vmatpush1.msra.mxu0 %v277
  %388 = vmatprep.subr.mxu0 0.0
  %389 = vmatpush1.msra.mxu0 %v280
  %390 = vmatprep.subr.mxu0 0.0
  %391 = vmatpush1.msra.mxu0 %v283
  %392 = vmatprep.subr.mxu0 0.0
  %393 = vmatpush1.msra.mxu0 %v286
  %394 = vmatprep.subr.mxu0 0.0
  %395 = vmatpush1.msra.mxu0 %v289
  %396 = vmatprep.subr.mxu0 0.0
  %397 = vmatpush1.msra.mxu0 %v292
  %398 = vmatprep.subr.mxu0 0.0
  %399 = vmatpush1.msra.mxu0 %v295
  %400 = vmatprep.subr.mxu0 0.0
  %401 = vmatpush1.msra.mxu0 %v298
  %402 = vmatprep.subr.mxu0 0.0
  %403 = vmatpush1.msra.mxu0 0.0
  %404 = vmatprep.subr.mxu0 0.0
  %405 = vmatpush1.msra.mxu0 0.0
  %406 = vmatprep.subr.mxu0 0.0
  %407 = vmatpush1.msra.mxu0 0.0
  %408 = vmatprep.subr.mxu0 0.0
  %409 = vmatpush1.msra.mxu0 0.0
  %410 = vmatprep.subr.mxu0 0.0
  %411 = vmatpush1.msra.mxu0 0.0
  %412 = vmatprep.subr.mxu0 0.0
  %413 = vmatpush1.msra.mxu0 0.0
  %414 = vmatprep.subr.mxu0 0.0
  %415 = vmatpush1.msra.mxu0 0.0
  %416 = vmatprep.subr.mxu0 0.0
  %417 = vmatpush1.msra.mxu0 0.0
  %418 = vmatprep.subr.mxu0 0.0
  %419 = vmatpush1.msra.mxu0 0.0
  %420 = vmatprep.subr.mxu0 0.0
  %421 = vmatpush1.msra.mxu0 0.0
  %422 = vmatprep.subr.mxu0 0.0
  %423 = vmatpush1.msra.mxu0 0.0
  %424 = vmatprep.subr.mxu0 0.0
  %425 = vmatpush1.msra.mxu0 0.0
  %426 = vmatprep.subr.mxu0 0.0
  %427 = vmatpush1.msra.mxu0 0.0
  %428 = vmatprep.subr.mxu0 0.0
  %429 = vmatpush1.msra.mxu0 0.0
  %430 = vmatprep.subr.mxu0 0.0
  %431 = vmatpush1.msra.mxu0 0.0
  %432 = vmatprep.subr.mxu0 0.0
  %433 = vmatpush1.msra.mxu0 0.0
  %434 = vmatprep.mubr.f32.mxu0 0.0
  %435 = vmatmul.mubr.f32.gmra.mrb[0].mxu0 %v245
  %v436 = vpop.f32.mrb[0].mxu0
  %v437 = vadd.f32 0.0, %v436
  %v438 = vpop.f32.mrb[0].mxu0
  %439 = vdwg.mxu0
  %v440 = vadd.f32 %v248, %v366
  %v441 = vxor.u32 %v440, 2147483648
  %v442 = vmul.f32 %v441, 1.442695
  %v443 = vpow.pop %v442
  %v444 = vadd.f32 %v443, 1.0
  %v445 = vrcp.pop %v444
  %v446 = vmul.f32 1.0, %v445
  %v447 = vadd.f32 %v249, %v368
  %v448 = vxor.u32 %v447, 2147483648
  %v449 = vmul.f32 %v448, 1.442695
  %v450 = vpow.pop %v449
  %v451 = vadd.f32 %v450, 1.0
  %v452 = vrcp.pop %v451
  %v453 = vmul.f32 1.0, %v452
  %v454 = vadd.f32 %v437, %v30
  %v455 = vmul.f32 %v446, %v454
  %v456 = vadd.f32 %v250, %v455
  %v457 = vtanh.pop %v456
  %v458 = vsub.f32 %v245, %v457
  %v459 = vmul.f32 %v453, %v458
  %v460 = vadd.f32 %v457, %v459
  %s461 = scalar_lea.vmem %s4, 8
  %462 = vst [vmem:[%s461] sm:$0xff] %v460
  %s463 = scalar_lea.vmem %s0, 48
  %v464 = vld [vmem:[%s463] sm:$0xff]
  %v465 = vld [vmem:[%s463 + $0x8] sm:$0xff]
  %v466 = vld [vmem:[%s463 + $0x10] sm:$0xff]
  %v467 = vld [vmem:[%s1] sm:$0xff]
  %v468 = vld [vmem:[%s1 + $0x8] sm:$0xff]
  %v469 = vld [vmem:[%s1 + $0x10] sm:$0xff]
  %v470 = vld [vmem:[%s1 + $0x18] sm:$0xff]
  %v471 = vld [vmem:[%s1 + $0x20] sm:$0xff]
  %v472 = vld [vmem:[%s1 + $0x28] sm:$0xff]
  %v473 = vld [vmem:[%s1 + $0x30] sm:$0xff]
  %v474 = vld [vmem:[%s1 + $0x38] sm:$0xff]
  %v475 = vld [vmem:[%s1 + $0x40] sm:$0xff]
  %v476 = vld [vmem:[%s1 + $0x48] sm:$0xff]
  %v477 = vld [vmem:[%s1 + $0x50] sm:$0xff]
  %v478 = vld [vmem:[%s1 + $0x58] sm:$0xff]
  %v479 = vld [vmem:[%s1 + $0x60] sm:$0xff]
  %v480 = vld [vmem:[%s1 + $0x68] sm:$0xff]
  %v481 = vld [vmem:[%s1 + $0x70] sm:$0xff]
  %v482 = vld [vmem:[%s1 + $0x78] sm:$0xff]
  %v483 = vld [vmem:[%s1 + $0x80] sm:$0xff]
  %v484 = vld [vmem:[%s1 + $0x88] sm:$0xff]
  %v485 = vld [vmem:[%s1 + $0x90] sm:$0xff]
  %v486 = vld [vmem:[%s1 + $0x98] sm:$0xff]
  %v487 = vld [vmem:[%s1 + $0xa0] sm:$0xff]
  %v488 = vld [vmem:[%s1 + $0xa8] sm:$0xff]
  %v489 = vld [vmem:[%s1 + $0xb0] sm:$0xff]
  %v490 = vld [vmem:[%s1 + $0xb8] sm:$0xff]
  %v491 = vld [vmem:[%s1 + $0xc0] sm:$0xff]
  %v492 = vld [vmem:[%s1 + $0xc8] sm:$0xff]
  %v493 = vld [vmem:[%s1 + $0xd0] sm:$0xff]
  %v494 = vld [vmem:[%s1 + $0xd8] sm:$0xff]
  %v495 = vld [vmem:[%s1 + $0xe0] sm:$0xff]
  %v496 = vld [vmem:[%s1 + $0xe8] sm:$0xff]
  %v497 = vld [vmem:[%s1 + $0xf0] sm:$0xff]
  %v498 = vld [vmem:[%s1 + $0xf8] sm:$0xff]
  %v499 = vld [vmem:[%s1 + $0x100] sm:$0xff]
  %v500 = vld [vmem:[%s1 + $0x108] sm:$0xff]
  %v501 = vld [vmem:[%s1 + $0x110] sm:$0xff]
  %v502 = vld [vmem:[%s1 + $0x118] sm:$0xff]
  %v503 = vld [vmem:[%s1 + $0x120] sm:$0xff]
  %v504 = vld [vmem:[%s1 + $0x128] sm:$0xff]
  %v505 = vld [vmem:[%s1 + $0x130] sm:$0xff]
  %v506 = vld [vmem:[%s1 + $0x138] sm:$0xff]
  %v507 = vld [vmem:[%s1 + $0x140] sm:$0xff]
  %v508 = vld [vmem:[%s1 + $0x148] sm:$0xff]
  %v509 = vld [vmem:[%s1 + $0x150] sm:$0xff]
  %v510 = vld [vmem:[%s1 + $0x158] sm:$0xff]
  %v511 = vld [vmem:[%s1 + $0x160] sm:$0xff]
  %v512 = vld [vmem:[%s1 + $0x168] sm:$0xff]
  %v513 = vld [vmem:[%s1 + $0x170] sm:$0xff]
  %v514 = vld [vmem:[%s1 + $0x178] sm:$0xff]
  %515 = vmatprep.subr.mxu0 %v468
  %516 = vmatpush1.msra.mxu0 %v467
  %517 = vmatprep.subr.mxu0 %v471
  %518 = vmatpush1.msra.mxu0 %v470
  %519 = vmatprep.subr.mxu0 %v474
  %520 = vmatpush1.msra.mxu0 %v473
  %521 = vmatprep.subr.mxu0 %v477
  %522 = vmatpush1.msra.mxu0 %v476
  %523 = vmatprep.subr.mxu0 %v480
  %524 = vmatpush1.msra.mxu0 %v479
  %525 = vmatprep.subr.mxu0 %v483
  %526 = vmatpush1.msra.mxu0 %v482
  %527 = vmatprep.subr.mxu0 %v486
  %528 = vmatpush1.msra.mxu0 %v485
  %529 = vmatprep.subr.mxu0 %v489
  %530 = vmatpush1.msra.mxu0 %v488
  %531 = vmatprep.subr.mxu0 %v492
  %532 = vmatpush1.msra.mxu0 %v491
  %533 = vmatprep.subr.mxu0 %v495
  %534 = vmatpush1.msra.mxu0 %v494
  %535 = vmatprep.subr.mxu0 %v498
  %536 = vmatpush1.msra.mxu0 %v497
  %537 = vmatprep.subr.mxu0 %v501
  %538 = vmatpush1.msra.mxu0 %v500
  %539 = vmatprep.subr.mxu0 %v504
  %540 = vmatpush1.msra.mxu0 %v503
  %541 = vmatprep.subr.mxu0 %v507
  %542 = vmatpush1.msra.mxu0 %v506
  %543 = vmatprep.subr.mxu0 %v510
  %544 = vmatpush1.msra.mxu0 %v509
  %545 = vmatprep.subr.mxu0 %v513
  %546 = vmatpush1.msra.mxu0 %v512
  %547 = vmatprep.subr.mxu0 0.0
  %548 = vmatpush1.msra.mxu0 0.0
  %549 = vmatprep.subr.mxu0 0.0
  %550 = vmatpush1.msra.mxu0 0.0
  %551 = vmatprep.subr.mxu0 0.0
  %552 = vmatpush1.msra.mxu0 0.0
  %553 = vmatprep.subr.mxu0 0.0
  %554 = vmatpush1.msra.mxu0 0.0
  %555 = vmatprep.subr.mxu0 0.0
  %556 = vmatpush1.msra.mxu0 0.0
  %557 = vmatprep.subr.mxu0 0.0
  %558 = vmatpush1.msra.mxu0 0.0
  %559 = vmatprep.subr.mxu0 0.0
  %560 = vmatpush1.msra.mxu0 0.0
  %561 = vmatprep.subr.mxu0 0.0
  %562 = vmatpush1.msra.mxu0 0.0
  %563 = vmatprep.subr.mxu0 0.0
  %564 = vmatpush1.msra.mxu0 0.0
  %565 = vmatprep.subr.mxu0 0.0
  %566 = vmatpush1.msra.mxu0 0.0
  %567 = vmatprep.subr.mxu0 0.0
  %568 = vmatpush1.msra.mxu0 0.0
  %569 = vmatprep.subr.mxu0 0.0
  %570 = vmatpush1.msra.mxu0 0.0
  %571 = vmatprep.subr.mxu0 0.0
  %572 = vmatpush1.msra.mxu0 0.0
  %573 = vmatprep.subr.mxu0 0.0
  %574 = vmatpush1.msra.mxu0 0.0
  %575 = vmatprep.subr.mxu0 0.0
  %576 = vmatpush1.msra.mxu0 0.0
  %577 = vmatprep.subr.mxu0 0.0
  %578 = vmatpush1.msra.mxu0 0.0
  %579 = vmatprep.mubr.f32.mxu0 0.0
  %580 = vmatmul.mubr.f32.gmra.mrb[0].mxu0 %v460
  %v581 = vpop.f32.mrb[0].mxu0
  %v582 = vadd.f32 0.0, %v581
  %v583 = vpop.f32.mrb[0].mxu0
  %v584 = vadd.f32 0.0, %v583
  %585 = vdwg.mxu0
  %586 = vmatprep.subr.mxu0 0.0
  %587 = vmatpush1.msra.mxu0 %v469
  %588 = vmatprep.subr.mxu0 0.0
  %589 = vmatpush1.msra.mxu0 %v472
  %590 = vmatprep.subr.mxu0 0.0
  %591 = vmatpush1.msra.mxu0 %v475
  %592 = vmatprep.subr.mxu0 0.0
  %593 = vmatpush1.msra.mxu0 %v478
  %594 = vmatprep.subr.mxu0 0.0
  %595 = vmatpush1.msra.mxu0 %v481
  %596 = vmatprep.subr.mxu0 0.0
  %597 = vmatpush1.msra.mxu0 %v484
  %598 = vmatprep.subr.mxu0 0.0
  %599 = vmatpush1.msra.mxu0 %v487
  %600 = vmatprep.subr.mxu0 0.0
  %601 = vmatpush1.msra.mxu0 %v490
  %602 = vmatprep.subr.mxu0 0.0
  %603 = vmatpush1.msra.mxu0 %v493
  %604 = vmatprep.subr.mxu0 0.0
  %605 = vmatpush1.msra.mxu0 %v496
  %606 = vmatprep.subr.mxu0 0.0
  %607 = vmatpush1.msra.mxu0 %v499
  %608 = vmatprep.subr.mxu0 0.0
  %609 = vmatpush1.msra.mxu0 %v502
  %610 = vmatprep.subr.mxu0 0.0
  %611 = vmatpush1.msra.mxu0 %v505
  %612 = vmatprep.subr.mxu0 0.0
  %613 = vmatpush1.msra.mxu0 %v508
  %614 = vmatprep.subr.mxu0 0.0
  %615 = vmatpush1.msra.mxu0 %v511
  %616 = vmatprep.subr.mxu0 0.0
  %617 = vmatpush1.msra.mxu0 %v514
  %618 = vmatprep.subr.mxu0 0.0
  %619 = vmatpush1.msra.mxu0 0.0
  %620 = vmatprep.subr.mxu0 0.0
  %621 = vmatpush1.msra.mxu0 0.0
  %622 = vmatprep.subr.mxu0 0.0
  %623 = vmatpush1.msra.mxu0 0.0
  %624 = vmatprep.subr.mxu0 0.0
  %625 = vmatpush1.msra.mxu0 0.0
  %626 = vmatprep.subr.mxu0 0.0
  %627 = vmatpush1.msra.mxu0 0.0
  %628 = vmatprep.subr.mxu0 0.0
  %629 = vmatpush1.msra.mxu0 0.0
  %630 = vmatprep.subr.mxu0 0.0
  %631 = vmatpush1.msra.mxu0 0.0
  %632 = vmatprep.subr.mxu0 0.0
  %633 = vmatpush1.msra.mxu0 0.0
  %634 = vmatprep.subr.mxu0 0.0
  %635 = vmatpush1.msra.mxu0 0.0
  %636 = vmatprep.subr.mxu0 0.0
  %637 = vmatpush1.msra.mxu0 0.0
  %638 = vmatprep.subr.mxu0 0.0
  %639 = vmatpush1.msra.mxu0 0.0
  %640 = vmatprep.subr.mxu0 0.0
  %641 = vmatpush1.msra.mxu0 0.0
  %642 = vmatprep.subr.mxu0 0.0
  %643 = vmatpush1.msra.mxu0 0.0
  %644 = vmatprep.subr.mxu0 0.0
  %645 = vmatpush1.msra.mxu0 0.0
  %646 = vmatprep.subr.mxu0 0.0
  %647 = vmatpush1.msra.mxu0 0.0
  %648 = vmatprep.subr.mxu0 0.0
  %649 = vmatpush1.msra.mxu0 0.0
  %650 = vmatprep.mubr.f32.mxu0 0.0
  %651 = vmatmul.mubr.f32.gmra.mrb[0].mxu0 %v460
  %v652 = vpop.f32.mrb[0].mxu0
  %v653 = vadd.f32 0.0, %v652
  %v654 = vpop.f32.mrb[0].mxu0
  %655 = vdwg.mxu0
  %v656 = vadd.f32 %v464, %v582
  %v657 = vxor.u32 %v656, 2147483648
  %v658 = vmul.f32 %v657, 1.442695
  %v659 = vpow.pop %v658
  %v660 = vadd.f32 %v659, 1.0
  %v661 = vrcp.pop %v660
  %v662 = vmul.f32 1.0, %v661
  %v663 = vadd.f32 %v465, %v584
  %v664 = vxor.u32 %v663, 2147483648
  %v665 = vmul.f32 %v664, 1.442695
  %v666 = vpow.pop %v665
  %v667 = vadd.f32 %v666, 1.0
  %v668 = vrcp.pop %v667
  %v669 = vmul.f32 1.0, %v668
  %v670 = vadd.f32 %v653, %v30
  %v671 = vmul.f32 %v662, %v670
  %v672 = vadd.f32 %v466, %v671
  %v673 = vtanh.pop %v672
  %v674 = vsub.f32 %v460, %v673
  %v675 = vmul.f32 %v669, %v674
  %v676 = vadd.f32 %v673, %v675
  %s677 = scalar_lea.vmem %s4, 16
  %678 = vst [vmem:[%s677] sm:$0xff] %v676
  %s679 = scalar_lea.vmem %s0, 72
  %v680 = vld [vmem:[%s679] sm:$0xff]
  %v681 = vld [vmem:[%s679 + $0x8] sm:$0xff]
  %v682 = vld [vmem:[%s679 + $0x10] sm:$0xff]
  %v683 = vld [vmem:[%s1] sm:$0xff]
  %v684 = vld [vmem:[%s1 + $0x8] sm:$0xff]
  %v685 = vld [vmem:[%s1 + $0x10] sm:$0xff]
  %v686 = vld [vmem:[%s1 + $0x18] sm:$0xff]
  %v687 = vld [vmem:[%s1 + $0x20] sm:$0xff]
  %v688 = vld [vmem:[%s1 + $0x28] sm:$0xff]
  %v689 = vld [vmem:[%s1 + $0x30] sm:$0xff]
  %v690 = vld [vmem:[%s1 + $0x38] sm:$0xff]
  %v691 = vld [vmem:[%s1 + $0x40] sm:$0xff]
  %v692 = vld [vmem:[%s1 + $0x48] sm:$0xff]
  %v693 = vld [vmem:[%s1 + $0x50] sm:$0xff]
  %v694 = vld [vmem:[%s1 + $0x58] sm:$0xff]
  %v695 = vld [vmem:[%s1 + $0x60] sm:$0xff]
  %v696 = vld [vmem:[%s1 + $0x68] sm:$0xff]
  %v697 = vld [vmem:[%s1 + $0x70] sm:$0xff]
  %v698 = vld [vmem:[%s1 + $0x78] sm:$0xff]
  %v699 = vld [vmem:[%s1 + $0x80] sm:$0xff]
  %v700 = vld [vmem:[%s1 + $0x88] sm:$0xff]
  %v701 = vld [vmem:[%s1 + $0x90] sm:$0xff]
  %v702 = vld [vmem:[%s1 + $0x98] sm:$0xff]
  %v703 = vld [vmem:[%s1 + $0xa0] sm:$0xff]
  %v704 = vld [vmem:[%s1 + $0xa8] sm:$0xff]
  %v705 = vld [vmem:[%s1 + $0xb0] sm:$0xff]
  %v706 = vld [vmem:[%s1 + $0xb8] sm:$0xff]
  %v707 = vld [vmem:[%s1 + $0xc0] sm:$0xff]
  %v708 = vld [vmem:[%s1 + $0xc8] sm:$0xff]
  %v709 = vld [vmem:[%s1 + $0xd0] sm:$0xff]
  %v710 = vld [vmem:[%s1 + $0xd8] sm:$0xff]
  %v711 = vld [vmem:[%s1 + $0xe0] sm:$0xff]
  %v712 = vld [vmem:[%s1 + $0xe8] sm:$0xff]
  %v713 = vld [vmem:[%s1 + $0xf0] sm:$0xff]
  %v714 = vld [vmem:[%s1 + $0xf8] sm:$0xff]
  %v715 = vld [vmem:[%s1 + $0x100] sm:$0xff]
  %v716 = vld [vmem:[%s1 + $0x108] sm:$0xff]
  %v717 = vld [vmem:[%s1 + $0x110] sm:$0xff]
  %v718 = vld [vmem:[%s1 + $0x118] sm:$0xff]
  %v719 = vld [vmem:[%s1 + $0x120] sm:$0xff]
  %v720 = vld [vmem:[%s1 + $0x128] sm:$0xff]
  %v721 = vld [vmem:[%s1 + $0x130] sm:$0xff]
  %v722 = vld [vmem:[%s1 + $0x138] sm:$0xff]
  %v723 = vld [vmem:[%s1 + $0x140] sm:$0xff]
  %v724 = vld [vmem:[%s1 + $0x148] sm:$0xff]
  %v725 = vld [vmem:[%s1 + $0x150] sm:$0xff]
  %v726 = vld [vmem:[%s1 + $0x158] sm:$0xff]
  %v727 = vld [vmem:[%s1 + $0x160] sm:$0xff]
  %v728 = vld [vmem:[%s1 + $0x168] sm:$0xff]
  %v729 = vld [vmem:[%s1 + $0x170] sm:$0xff]
  %v730 = vld [vmem:[%s1 + $0x178] sm:$0xff]
  %731 = vmatprep.subr.mxu0 %v684
  %732 = vmatpush1.msra.mxu0 %v683
  %733 = vmatprep.subr.mxu0 %v687
  %734 = vmatpush1.msra.mxu0 %v686
  %735 = vmatprep.subr.mxu0 %v690
  %736 = vmatpush1.msra.mxu0 %v689
  %737 = vmatprep.subr.mxu0 %v693
  %738 = vmatpush1.msra.mxu0 %v692
  %739 = vmatprep.subr.mxu0 %v696
  %740 = vmatpush1.msra.mxu0 %v695
  %741 = vmatprep.subr.mxu0 %v699
  %742 = vmatpush1.msra.mxu0 %v698
  %743 = vmatprep.subr.mxu0 %v702
  %744 = vmatpush1.msra.mxu0 %v701
  %745 = vmatprep.subr.mxu0 %v705
  %746 = vmatpush1.msra.mxu0 %v704
  %747 = vmatprep.subr.mxu0 %v708
  %748 = vmatpush1.msra.mxu0 %v707
  %749 = vmatprep.subr.mxu0 %v711
  %750 = vmatpush1.msra.mxu0 %v710
  %751 = vmatprep.subr.mxu0 %v714
  %752 = vmatpush1.msra.mxu0 %v713
  %753 = vmatprep.subr.mxu0 %v717
  %754 = vmatpush1.msra.mxu0 %v716
  %755 = vmatprep.subr.mxu0 %v720
  %756 = vmatpush1.msra.mxu0 %v719
  %757 = vmatprep.subr.mxu0 %v723
  %758 = vmatpush1.msra.mxu0 %v722
  %759 = vmatprep.subr.mxu0 %v726
  %760 = vmatpush1.msra.mxu0 %v725
  %761 = vmatprep.subr.mxu0 %v729
  %762 = vmatpush1.msra.mxu0 %v728
  %763 = vmatprep.subr.mxu0 0.0
  %764 = vmatpush1.msra.mxu0 0.0
  %765 = vmatprep.subr.mxu0 0.0
  %766 = vmatpush1.msra.mxu0 0.0
  %767 = vmatprep.subr.mxu0 0.0
  %768 = vmatpush1.msra.mxu0 0.0
  %769 = vmatprep.subr.mxu0 0.0
  %770 = vmatpush1.msra.mxu0 0.0
  %771 = vmatprep.subr.mxu0 0.0
  %772 = vmatpush1.msra.mxu0 0.0
  %773 = vmatprep.subr.mxu0 0.0
  %774 = vmatpush1.msra.mxu0 0.0
  %775 = vmatprep.subr.mxu0 0.0
  %776 = vmatpush1.msra.mxu0 0.0
  %777 = vmatprep.subr.mxu0 0.0
  %778 = vmatpush1.msra.mxu0 0.0
  %779 = vmatprep.subr.mxu0 0.0
  %780 = vmatpush1.msra.mxu0 0.0
  %781 = vmatprep.subr.mxu0 0.0
  %782 = vmatpush1.msra.mxu0 0.0
  %783 = vmatprep.subr.mxu0 0.0
  %784 = vmatpush1.msra.mxu0 0.0
  %785 = vmatprep.subr.mxu0 0.0
  %786 = vmatpush1.msra.mxu0 0.0
  %787 = vmatprep.subr.mxu0 0.0
  %788 = vmatpush1.msra.mxu0 0.0
  %789 = vmatprep.subr.mxu0 0.0
  %790 = vmatpush1.msra.mxu0 0.0
  %791 = vmatprep.subr.mxu0 0.0
  %792 = vmatpush1.msra.mxu0 0.0
  %793 = vmatprep.subr.mxu0 0.0
  %794 = vmatpush1.msra.mxu0 0.0
  %795 = vmatprep.mubr.f32.mxu0 0.0
  %796 = vmatmul.mubr.f32.gmra.mrb[0].mxu0 %v676
  %v797 = vpop.f32.mrb[0].mxu0
  %v798 = vadd.f32 0.0, %v797
  %v799 = vpop.f32.mrb[0].mxu0
  %v800 = vadd.f32 0.0, %v799
  %801 = vdwg.mxu0
  %802 = vmatprep.subr.mxu0 0.0
  %803 = vmatpush1.msra.mxu0 %v685
  %804 = vmatprep.subr.mxu0 0.0
  %805 = vmatpush1.msra.mxu0 %v688
  %806 = vmatprep.subr.mxu0 0.0
  %807 = vmatpush1.msra.mxu0 %v691
  %808 = vmatprep.subr.mxu0 0.0
  %809 = vmatpush1.msra.mxu0 %v694
  %810 = vmatprep.subr.mxu0 0.0
  %811 = vmatpush1.msra.mxu0 %v697
  %812 = vmatprep.subr.mxu0 0.0
  %813 = vmatpush1.msra.mxu0 %v700
  %814 = vmatprep.subr.mxu0 0.0
  %815 = vmatpush1.msra.mxu0 %v703
  %816 = vmatprep.subr.mxu0 0.0
  %817 = vmatpush1.msra.mxu0 %v706
  %818 = vmatprep.subr.mxu0 0.0
  %819 = vmatpush1.msra.mxu0 %v709
  %820 = vmatprep.subr.mxu0 0.0
  %821 = vmatpush1.msra.mxu0 %v712
  %822 = vmatprep.subr.mxu0 0.0
  %823 = vmatpush1.msra.mxu0 %v715
  %824 = vmatprep.subr.mxu0 0.0
  %825 = vmatpush1.msra.mxu0 %v718
  %826 = vmatprep.subr.mxu0 0.0
  %827 = vmatpush1.msra.mxu0 %v721
  %828 = vmatprep.subr.mxu0 0.0
  %829 = vmatpush1.msra.mxu0 %v724
  %830 = vmatprep.subr.mxu0 0.0
  %831 = vmatpush1.msra.mxu0 %v727
  %832 = vmatprep.subr.mxu0 0.0
  %833 = vmatpush1.msra.mxu0 %v730
  %834 = vmatprep.subr.mxu0 0.0
  %835 = vmatpush1.msra.mxu0 0.0
  %836 = vmatprep.subr.mxu0 0.0
  %837 = vmatpush1.msra.mxu0 0.0
  %838 = vmatprep.subr.mxu0 0.0
  %839 = vmatpush1.msra.mxu0 0.0
  %840 = vmatprep.subr.mxu0 0.0
  %841 = vmatpush1.msra.mxu0 0.0
  %842 = vmatprep.subr.mxu0 0.0
  %843 = vmatpush1.msra.mxu0 0.0
  %844 = vmatprep.subr.mxu0 0.0
  %845 = vmatpush1.msra.mxu0 0.0
  %846 = vmatprep.subr.mxu0 0.0
  %847 = vmatpush1.msra.mxu0 0.0
  %848 = vmatprep.subr.mxu0 0.0
  %849 = vmatpush1.msra.mxu0 0.0
  %850 = vmatprep.subr.mxu0 0.0
  %851 = vmatpush1.msra.mxu0 0.0
  %852 = vmatprep.subr.mxu0 0.0
  %853 = vmatpush1.msra.mxu0 0.0
  %854 = vmatprep.subr.mxu0 0.0
  %855 = vmatpush1.msra.mxu0 0.0
  %856 = vmatprep.subr.mxu0 0.0
  %857 = vmatpush1.msra.mxu0 0.0
  %858 = vmatprep.subr.mxu0 0.0
  %859 = vmatpush1.msra.mxu0 0.0
  %860 = vmatprep.subr.mxu0 0.0
  %861 = vmatpush1.msra.mxu0 0.0
  %862 = vmatprep.subr.mxu0 0.0
  %863 = vmatpush1.msra.mxu0 0.0
  %864 = vmatprep.subr.mxu0 0.0
  %865 = vmatpush1.msra.mxu0 0.0
  %866 = vmatprep.mubr.f32.mxu0 0.0
  %867 = vmatmul.mubr.f32.gmra.mrb[0].mxu0 %v676
  %v868 = vpop.f32.mrb[0].mxu0
  %v869 = vadd.f32 0.0, %v868
  %v870 = vpop.f32.mrb[0].mxu0
  %871 = vdwg.mxu0
  %v872 = vadd.f32 %v680, %v798
  %v873 = vxor.u32 %v872, 2147483648
  %v874 = vmul.f32 %v873, 1.442695
  %v875 = vpow.pop %v874
  %v876 = vadd.f32 %v875, 1.0
  %v877 = vrcp.pop %v876
  %v878 = vmul.f32 1.0, %v877
  %v879 = vadd.f32 %v681, %v800
  %v880 = vxor.u32 %v879, 2147483648
  %v881 = vmul.f32 %v880, 1.442695
  %v882 = vpow.pop %v881
  %v883 = vadd.f32 %v882, 1.0
  %v884 = vrcp.pop %v883
  %v885 = vmul.f32 1.0, %v884
  %v886 = vadd.f32 %v869, %v30
  %v887 = vmul.f32 %v878, %v886
  %v888 = vadd.f32 %v682, %v887
  %v889 = vtanh.pop %v888
  %v890 = vsub.f32 %v676, %v889
  %v891 = vmul.f32 %v885, %v890
  %v892 = vadd.f32 %v889, %v891
  %s893 = scalar_lea.vmem %s4, 24
  %894 = vst [vmem:[%s893] sm:$0xff] %v892
  %s895 = scalar_lea.vmem %s0, 96
  %v896 = vld [vmem:[%s895] sm:$0xff]
  %v897 = vld [vmem:[%s895 + $0x8] sm:$0xff]
  %v898 = vld [vmem:[%s895 + $0x10] sm:$0xff]
  %v899 = vld [vmem:[%s1] sm:$0xff]
  %v900 = vld [vmem:[%s1 + $0x8] sm:$0xff]
  %v901 = vld [vmem:[%s1 + $0x10] sm:$0xff]
  %v902 = vld [vmem:[%s1 + $0x18] sm:$0xff]
  %v903 = vld [vmem:[%s1 + $0x20] sm:$0xff]
  %v904 = vld [vmem:[%s1 + $0x28] sm:$0xff]
  %v905 = vld [vmem:[%s1 + $0x30] sm:$0xff]
  %v906 = vld [vmem:[%s1 + $0x38] sm:$0xff]
  %v907 = vld [vmem:[%s1 + $0x40] sm:$0xff]
  %v908 = vld [vmem:[%s1 + $0x48] sm:$0xff]
  %v909 = vld [vmem:[%s1 + $0x50] sm:$0xff]
  %v910 = vld [vmem:[%s1 + $0x58] sm:$0xff]
  %v911 = vld [vmem:[%s1 + $0x60] sm:$0xff]
  %v912 = vld [vmem:[%s1 + $0x68] sm:$0xff]
  %v913 = vld [vmem:[%s1 + $0x70] sm:$0xff]
  %v914 = vld [vmem:[%s1 + $0x78] sm:$0xff]
  %v915 = vld [vmem:[%s1 + $0x80] sm:$0xff]
  %v916 = vld [vmem:[%s1 + $0x88] sm:$0xff]
  %v917 = vld [vmem:[%s1 + $0x90] sm:$0xff]
  %v918 = vld [vmem:[%s1 + $0x98] sm:$0xff]
  %v919 = vld [vmem:[%s1 + $0xa0] sm:$0xff]
  %v920 = vld [vmem:[%s1 + $0xa8] sm:$0xff]
  %v921 = vld [vmem:[%s1 + $0xb0] sm:$0xff]
  %v922 = vld [vmem:[%s1 + $0xb8] sm:$0xff]
  %v923 = vld [vmem:[%s1 + $0xc0] sm:$0xff]
  %v924 = vld [vmem:[%s1 + $0xc8] sm:$0xff]
  %v925 = vld [vmem:[%s1 + $0xd0] sm:$0xff]
  %v926 = vld [vmem:[%s1 + $0xd8] sm:$0xff]
  %v927 = vld [vmem:[%s1 + $0xe0] sm:$0xff]
  %v928 = vld [vmem:[%s1 + $0xe8] sm:$0xff]
  %v929 = vld [vmem:[%s1 + $0xf0] sm:$0xff]
  %v930 = vld [vmem:[%s1 + $0xf8] sm:$0xff]
  %v931 = vld [vmem:[%s1 + $0x100] sm:$0xff]
  %v932 = vld [vmem:[%s1 + $0x108] sm:$0xff]
  %v933 = vld [vmem:[%s1 + $0x110] sm:$0xff]
  %v934 = vld [vmem:[%s1 + $0x118] sm:$0xff]
  %v935 = vld [vmem:[%s1 + $0x120] sm:$0xff]
  %v936 = vld [vmem:[%s1 + $0x128] sm:$0xff]
  %v937 = vld [vmem:[%s1 + $0x130] sm:$0xff]
  %v938 = vld [vmem:[%s1 + $0x138] sm:$0xff]
  %v939 = vld [vmem:[%s1 + $0x140] sm:$0xff]
  %v940 = vld [vmem:[%s1 + $0x148] sm:$0xff]
  %v941 = vld [vmem:[%s1 + $0x150] sm:$0xff]
  %v942 = vld [vmem:[%s1 + $0x158] sm:$0xff]
  %v943 = vld [vmem:[%s1 + $0x160] sm:$0xff]
  %v944 = vld [vmem:[%s1 + $0x168] sm:$0xff]
  %v945 = vld [vmem:[%s1 + $0x170] sm:$0xff]
  %v946 = vld [vmem:[%s1 + $0x178] sm:$0xff]
  %947 = vmatprep.subr.mxu0 %v900
  %948 = vmatpush1.msra.mxu0 %v899
  %949 = vmatprep.subr.mxu0 %v903
  %950 = vmatpush1.msra.mxu0 %v902
  %951 = vmatprep.subr.mxu0 %v906
  %952 = vmatpush1.msra.mxu0 %v905
  %953 = vmatprep.subr.mxu0 %v909
  %954 = vmatpush1.msra.mxu0 %v908
  %955 = vmatprep.subr.mxu0 %v912
  %956 = vmatpush1.msra.mxu0 %v911
  %957 = vmatprep.subr.mxu0 %v915
  %958 = vmatpush1.msra.mxu0 %v914
  %959 = vmatprep.subr.mxu0 %v918
  %960 = vmatpush1.msra.mxu0 %v917
  %961 = vmatprep.subr.mxu0 %v921
  %962 = vmatpush1.msra.mxu0 %v920
  %963 = vmatprep.subr.mxu0 %v924
  %964 = vmatpush1.msra.mxu0 %v923
  %965 = vmatprep.subr.mxu0 %v927
  %966 = vmatpush1.msra.mxu0 %v926
  %967 = vmatprep.subr.mxu0 %v930
  %968 = vmatpush1.msra.mxu0 %v929
  %969 = vmatprep.subr.mxu0 %v933
  %970 = vmatpush1.msra.mxu0 %v932
  %971 = vmatprep.subr.mxu0 %v936
  %972 = vmatpush1.msra.mxu0 %v935
  %973 = vmatprep.subr.mxu0 %v939
  %974 = vmatpush1.msra.mxu0 %v938
  %975 = vmatprep.subr.mxu0 %v942
  %976 = vmatpush1.msra.mxu0 %v941
  %977 = vmatprep.subr.mxu0 %v945
  %978 = vmatpush1.msra.mxu0 %v944
  %979 = vmatprep.subr.mxu0 0.0
  %980 = vmatpush1.msra.mxu0 0.0
  %981 = vmatprep.subr.mxu0 0.0
  %982 = vmatpush1.msra.mxu0 0.0
  %983 = vmatprep.subr.mxu0 0.0
  %984 = vmatpush1.msra.mxu0 0.0
  %985 = vmatprep.subr.mxu0 0.0
  %986 = vmatpush1.msra.mxu0 0.0
  %987 = vmatprep.subr.mxu0 0.0
  %988 = vmatpush1.msra.mxu0 0.0
  %989 = vmatprep.subr.mxu0 0.0
  %990 = vmatpush1.msra.mxu0 0.0
  %991 = vmatprep.subr.mxu0 0.0
  %992 = vmatpush1.msra.mxu0 0.0
  %993 = vmatprep.subr.mxu0 0.0
  %994 = vmatpush1.msra.mxu0 0.0
  %995 = vmatprep.subr.mxu0 0.0
  %996 = vmatpush1.msra.mxu0 0.0
  %997 = vmatprep.subr.mxu0 0.0
  %998 = vmatpush1.msra.mxu0 0.0
  %999 = vmatprep.subr.mxu0 0.0
  %1000 = vmatpush1.msra.mxu0 0.0
  %1001 = vmatprep.subr.mxu0 0.0
  %1002 = vmatpush1.msra.mxu0 0.0
  %1003 = vmatprep.subr.mxu0 0.0
  %1004 = vmatpush1.msra.mxu0 0.0
  %1005 = vmatprep.subr.mxu0 0.0
  %1006 = vmatpush1.msra.mxu0 0.0
  %1007 = vmatprep.subr.mxu0 0.0
  %1008 = vmatpush1.msra.mxu0 0.0
  %1009 = vmatprep.subr.mxu0 0.0
  %1010 = vmatpush1.msra.mxu0 0.0
  %1011 = vmatprep.mubr.f32.mxu0 0.0
  %1012 = vmatmul.mubr.f32.gmra.mrb[0].mxu0 %v892
  %v1013 = vpop.f32.mrb[0].mxu0
  %v1014 = vadd.f32 0.0, %v1013
  %v1015 = vpop.f32.mrb[0].mxu0
  %v1016 = vadd.f32 0.0, %v1015
  %1017 = vdwg.mxu0
  %1018 = vmatprep.subr.mxu0 0.0
  %1019 = vmatpush1.msra.mxu0 %v901
  %1020 = vmatprep.subr.mxu0 0.0
  %1021 = vmatpush1.msra.mxu0 %v904
  %1022 = vmatprep.subr.mxu0 0.0
  %1023 = vmatpush1.msra.mxu0 %v907
  %1024 = vmatprep.subr.mxu0 0.0
  %1025 = vmatpush1.msra.mxu0 %v910
  %1026 = vmatprep.subr.mxu0 0.0
  %1027 = vmatpush1.msra.mxu0 %v913
  %1028 = vmatprep.subr.mxu0 0.0
  %1029 = vmatpush1.msra.mxu0 %v916
  %1030 = vmatprep.subr.mxu0 0.0
  %1031 = vmatpush1.msra.mxu0 %v919
  %1032 = vmatprep.subr.mxu0 0.0
  %1033 = vmatpush1.msra.mxu0 %v922
  %1034 = vmatprep.subr.mxu0 0.0
  %1035 = vmatpush1.msra.mxu0 %v925
  %1036 = vmatprep.subr.mxu0 0.0
  %1037 = vmatpush1.msra.mxu0 %v928
  %1038 = vmatprep.subr.mxu0 0.0
  %1039 = vmatpush1.msra.mxu0 %v931
  %1040 = vmatprep.subr.mxu0 0.0
  %1041 = vmatpush1.msra.mxu0 %v934
  %1042 = vmatprep.subr.mxu0 0.0
  %1043 = vmatpush1.msra.mxu0 %v937
  %1044 = vmatprep.subr.mxu0 0.0
  %1045 = vmatpush1.msra.mxu0 %v940
  %1046 = vmatprep.subr.mxu0 0.0
  %1047 = vmatpush1.msra.mxu0 %v943
  %1048 = vmatprep.subr.mxu0 0.0
  %1049 = vmatpush1.msra.mxu0 %v946
  %1050 = vmatprep.subr.mxu0 0.0
  %1051 = vmatpush1.msra.mxu0 0.0
  %1052 = vmatprep.subr.mxu0 0.0
  %1053 = vmatpush1.msra.mxu0 0.0
  %1054 = vmatprep.subr.mxu0 0.0
  %1055 = vmatpush1.msra.mxu0 0.0
  %1056 = vmatprep.subr.mxu0 0.0
  %1057 = vmatpush1.msra.mxu0 0.0
  %1058 = vmatprep.subr.mxu0 0.0
  %1059 = vmatpush1.msra.mxu0 0.0
  %1060 = vmatprep.subr.mxu0 0.0
  %1061 = vmatpush1.msra.mxu0 0.0
  %1062 = vmatprep.subr.mxu0 0.0
  %1063 = vmatpush1.msra.mxu0 0.0
  %1064 = vmatprep.subr.mxu0 0.0
  %1065 = vmatpush1.msra.mxu0 0.0
  %1066 = vmatprep.subr.mxu0 0.0
  %1067 = vmatpush1.msra.mxu0 0.0
  %1068 = vmatprep.subr.mxu0 0.0
  %1069 = vmatpush1.msra.mxu0 0.0
  %1070 = vmatprep.subr.mxu0 0.0
  %1071 = vmatpush1.msra.mxu0 0.0
  %1072 = vmatprep.subr.mxu0 0.0
  %1073 = vmatpush1.msra.mxu0 0.0
  %1074 = vmatprep.subr.mxu0 0.0
  %1075 = vmatpush1.msra.mxu0 0.0
  %1076 = vmatprep.subr.mxu0 0.0
  %1077 = vmatpush1.msra.mxu0 0.0
  %1078 = vmatprep.subr.mxu0 0.0
  %1079 = vmatpush1.msra.mxu0 0.0
  %1080 = vmatprep.subr.mxu0 0.0
  %1081 = vmatpush1.msra.mxu0 0.0
  %1082 = vmatprep.mubr.f32.mxu0 0.0
  %1083 = vmatmul.mubr.f32.gmra.mrb[0].mxu0 %v892
  %v1084 = vpop.f32.mrb[0].mxu0
  %v1085 = vadd.f32 0.0, %v1084
  %v1086 = vpop.f32.mrb[0].mxu0
  %1087 = vdwg.mxu0
  %v1088 = vadd.f32 %v896, %v1014
  %v1089 = vxor.u32 %v1088, 2147483648
  %v1090 = vmul.f32 %v1089, 1.442695
  %v1091 = vpow.pop %v1090
  %v1092 = vadd.f32 %v1091, 1.0
  %v1093 = vrcp.pop %v1092
  %v1094 = vmul.f32 1.0, %v1093
  %v1095 = vadd.f32 %v897, %v1016
  %v1096 = vxor.u32 %v1095, 2147483648
  %v1097 = vmul.f32 %v1096, 1.442695
  %v1098 = vpow.pop %v1097
  %v1099 = vadd.f32 %v1098, 1.0
  %v1100 = vrcp.pop %v1099
  %v1101 = vmul.f32 1.0, %v1100
  %v1102 = vadd.f32 %v1085, %v30
  %v1103 = vmul.f32 %v1094, %v1102
  %v1104 = vadd.f32 %v898, %v1103
  %v1105 = vtanh.pop %v1104
  %v1106 = vsub.f32 %v892, %v1105
  %v1107 = vmul.f32 %v1101, %v1106
  %v1108 = vadd.f32 %v1105, %v1107
  %s1109 = scalar_lea.vmem %s4, 32
  %1110 = vst [vmem:[%s1109] sm:$0xff] %v1108
  %s1111 = scalar_lea.vmem %s0, 120
  %v1112 = vld [vmem:[%s1111] sm:$0xff]
  %v1113 = vld [vmem:[%s1111 + $0x8] sm:$0xff]
  %v1114 = vld [vmem:[%s1111 + $0x10] sm:$0xff]
  %v1115 = vld [vmem:[%s1] sm:$0xff]
  %v1116 = vld [vmem:[%s1 + $0x8] sm:$0xff]
  %v1117 = vld [vmem:[%s1 + $0x10] sm:$0xff]
  %v1118 = vld [vmem:[%s1 + $0x18] sm:$0xff]
  %v1119 = vld [vmem:[%s1 + $0x20] sm:$0xff]
  %v1120 = vld [vmem:[%s1 + $0x28] sm:$0xff]
  %v1121 = vld [vmem:[%s1 + $0x30] sm:$0xff]
  %v1122 = vld [vmem:[%s1 + $0x38] sm:$0xff]
  %v1123 = vld [vmem:[%s1 + $0x40] sm:$0xff]
  %v1124 = vld [vmem:[%s1 + $0x48] sm:$0xff]
  %v1125 = vld [vmem:[%s1 + $0x50] sm:$0xff]
  %v1126 = vld [vmem:[%s1 + $0x58] sm:$0xff]
  %v1127 = vld [vmem:[%s1 + $0x60] sm:$0xff]
  %v1128 = vld [vmem:[%s1 + $0x68] sm:$0xff]
  %v1129 = vld [vmem:[%s1 + $0x70] sm:$0xff]
  %v1130 = vld [vmem:[%s1 + $0x78] sm:$0xff]
  %v1131 = vld [vmem:[%s1 + $0x80] sm:$0xff]
  %v1132 = vld [vmem:[%s1 + $0x88] sm:$0xff]
  %v1133 = vld [vmem:[%s1 + $0x90] sm:$0xff]
  %v1134 = vld [vmem:[%s1 + $0x98] sm:$0xff]
  %v1135 = vld [vmem:[%s1 + $0xa0] sm:$0xff]
  %v1136 = vld [vmem:[%s1 + $0xa8] sm:$0xff]
  %v1137 = vld [vmem:[%s1 + $0xb0] sm:$0xff]
  %v1138 = vld [vmem:[%s1 + $0xb8] sm:$0xff]
  %v1139 = vld [vmem:[%s1 + $0xc0] sm:$0xff]
  %v1140 = vld [vmem:[%s1 + $0xc8] sm:$0xff]
  %v1141 = vld [vmem:[%s1 + $0xd0] sm:$0xff]
  %v1142 = vld [vmem:[%s1 + $0xd8] sm:$0xff]
  %v1143 = vld [vmem:[%s1 + $0xe0] sm:$0xff]
  %v1144 = vld [vmem:[%s1 + $0xe8] sm:$0xff]
  %v1145 = vld [vmem:[%s1 + $0xf0] sm:$0xff]
  %v1146 = vld [vmem:[%s1 + $0xf8] sm:$0xff]
  %v1147 = vld [vmem:[%s1 + $0x100] sm:$0xff]
  %v1148 = vld [vmem:[%s1 + $0x108] sm:$0xff]
  %v1149 = vld [vmem:[%s1 + $0x110] sm:$0xff]
  %v1150 = vld [vmem:[%s1 + $0x118] sm:$0xff]
  %v1151 = vld [vmem:[%s1 + $0x120] sm:$0xff]
  %v1152 = vld [vmem:[%s1 + $0x128] sm:$0xff]
  %v1153 = vld [vmem:[%s1 + $0x130] sm:$0xff]
  %v1154 = vld [vmem:[%s1 + $0x138] sm:$0xff]
  %v1155 = vld [vmem:[%s1 + $0x140] sm:$0xff]
  %v1156 = vld [vmem:[%s1 + $0x148] sm:$0xff]
  %v1157 = vld [vmem:[%s1 + $0x150] sm:$0xff]
  %v1158 = vld [vmem:[%s1 + $0x158] sm:$0xff]
  %v1159 = vld [vmem:[%s1 + $0x160] sm:$0xff]
  %v1160 = vld [vmem:[%s1 + $0x168] sm:$0xff]
  %v1161 = vld [vmem:[%s1 + $0x170] sm:$0xff]
  %v1162 = vld [vmem:[%s1 + $0x178] sm:$0xff]
  %1163 = vmatprep.subr.mxu0 %v1116
  %1164 = vmatpush1.msra.mxu0 %v1115
  %1165 = vmatprep.subr.mxu0 %v1119
  %1166 = vmatpush1.msra.mxu0 %v1118
  %1167 = vmatprep.subr.mxu0 %v1122
  %1168 = vmatpush1.msra.mxu0 %v1121
  %1169 = vmatprep.subr.mxu0 %v1125
  %1170 = vmatpush1.msra.mxu0 %v1124
  %1171 = vmatprep.subr.mxu0 %v1128
  %1172 = vmatpush1.msra.mxu0 %v1127
  %1173 = vmatprep.subr.mxu0 %v1131
  %1174 = vmatpush1.msra.mxu0 %v1130
  %1175 = vmatprep.subr.mxu0 %v1134
  %1176 = vmatpush1.msra.mxu0 %v1133
  %1177 = vmatprep.subr.mxu0 %v1137
  %1178 = vmatpush1.msra.mxu0 %v1136
  %1179 = vmatprep.subr.mxu0 %v1140
  %1180 = vmatpush1.msra.mxu0 %v1139
  %1181 = vmatprep.subr.mxu0 %v1143
  %1182 = vmatpush1.msra.mxu0 %v1142
  %1183 = vmatprep.subr.mxu0 %v1146
  %1184 = vmatpush1.msra.mxu0 %v1145
  %1185 = vmatprep.subr.mxu0 %v1149
  %1186 = vmatpush1.msra.mxu0 %v1148
  %1187 = vmatprep.subr.mxu0 %v1152
  %1188 = vmatpush1.msra.mxu0 %v1151
  %1189 = vmatprep.subr.mxu0 %v1155
  %1190 = vmatpush1.msra.mxu0 %v1154
  %1191 = vmatprep.subr.mxu0 %v1158
  %1192 = vmatpush1.msra.mxu0 %v1157
  %1193 = vmatprep.subr.mxu0 %v1161
  %1194 = vmatpush1.msra.mxu0 %v1160
  %1195 = vmatprep.subr.mxu0 0.0
  %1196 = vmatpush1.msra.mxu0 0.0
  %1197 = vmatprep.subr.mxu0 0.0
  %1198 = vmatpush1.msra.mxu0 0.0
  %1199 = vmatprep.subr.mxu0 0.0
  %1200 = vmatpush1.msra.mxu0 0.0
  %1201 = vmatprep.subr.mxu0 0.0
  %1202 = vmatpush1.msra.mxu0 0.0
  %1203 = vmatprep.subr.mxu0 0.0
  %1204 = vmatpush1.msra.mxu0 0.0
  %1205 = vmatprep.subr.mxu0 0.0
  %1206 = vmatpush1.msra.mxu0 0.0
  %1207 = vmatprep.subr.mxu0 0.0
  %1208 = vmatpush1.msra.mxu0 0.0
  %1209 = vmatprep.subr.mxu0 0.0
  %1210 = vmatpush1.msra.mxu0 0.0
  %1211 = vmatprep.subr.mxu0 0.0
  %1212 = vmatpush1.msra.mxu0 0.0
  %1213 = vmatprep.subr.mxu0 0.0
  %1214 = vmatpush1.msra.mxu0 0.0
  %1215 = vmatprep.subr.mxu0 0.0
  %1216 = vmatpush1.msra.mxu0 0.0
  %1217 = vmatprep.subr.mxu0 0.0
  %1218 = vmatpush1.msra.mxu0 0.0
  %1219 = vmatprep.subr.mxu0 0.0
  %1220 = vmatpush1.msra.mxu0 0.0
  %1221 = vmatprep.subr.mxu0 0.0
  %1222 = vmatpush1.msra.mxu0 0.0
  %1223 = vmatprep.subr.mxu0 0.0
  %1224 = vmatpush1.msra.mxu0 0.0
  %1225 = vmatprep.subr.mxu0 0.0
  %1226 = vmatpush1.msra.mxu0 0.0
  %1227 = vmatprep.mubr.f32.mxu0 0.0
  %1228 = vmatmul.mubr.f32.gmra.mrb[0].mxu0 %v1108
  %v1229 = vpop.f32.mrb[0].mxu0
  %v1230 = vadd.f32 0.0, %v1229
  %v1231 = vpop.f32.mrb[0].mxu0
  %v1232 = vadd.f32 0.0, %v1231
  %1233 = vdwg.mxu0
  %1234 = vmatprep.subr.mxu0 0.0
  %1235 = vmatpush1.msra.mxu0 %v1117
  %1236 = vmatprep.subr.mxu0 0.0
  %1237 = vmatpush1.msra.mxu0 %v1120
  %1238 = vmatprep.subr.mxu0 0.0
  %1239 = vmatpush1.msra.mxu0 %v1123
  %1240 = vmatprep.subr.mxu0 0.0
  %1241 = vmatpush1.msra.mxu0 %v1126
  %1242 = vmatprep.subr.mxu0 0.0
  %1243 = vmatpush1.msra.mxu0 %v1129
  %1244 = vmatprep.subr.mxu0 0.0
  %1245 = vmatpush1.msra.mxu0 %v1132
  %1246 = vmatprep.subr.mxu0 0.0
  %1247 = vmatpush1.msra.mxu0 %v1135
  %1248 = vmatprep.subr.mxu0 0.0
  %1249 = vmatpush1.msra.mxu0 %v1138
  %1250 = vmatprep.subr.mxu0 0.0
  %1251 = vmatpush1.msra.mxu0 %v1141
  %1252 = vmatprep.subr.mxu0 0.0
  %1253 = vmatpush1.msra.mxu0 %v1144
  %1254 = vmatprep.subr.mxu0 0.0
  %1255 = vmatpush1.msra.mxu0 %v1147
  %1256 = vmatprep.subr.mxu0 0.0
  %1257 = vmatpush1.msra.mxu0 %v1150
  %1258 = vmatprep.subr.mxu0 0.0
  %1259 = vmatpush1.msra.mxu0 %v1153
  %1260 = vmatprep.subr.mxu0 0.0
  %1261 = vmatpush1.msra.mxu0 %v1156
  %1262 = vmatprep.subr.mxu0 0.0
  %1263 = vmatpush1.msra.mxu0 %v1159
  %1264 = vmatprep.subr.mxu0 0.0
  %1265 = vmatpush1.msra.mxu0 %v1162
  %1266 = vmatprep.subr.mxu0 0.0
  %1267 = vmatpush1.msra.mxu0 0.0
  %1268 = vmatprep.subr.mxu0 0.0
  %1269 = vmatpush1.msra.mxu0 0.0
  %1270 = vmatprep.subr.mxu0 0.0
  %1271 = vmatpush1.msra.mxu0 0.0
  %1272 = vmatprep.subr.mxu0 0.0
  %1273 = vmatpush1.msra.mxu0 0.0
  %1274 = vmatprep.subr.mxu0 0.0
  %1275 = vmatpush1.msra.mxu0 0.0
  %1276 = vmatprep.subr.mxu0 0.0
  %1277 = vmatpush1.msra.mxu0 0.0
  %1278 = vmatprep.subr.mxu0 0.0
  %1279 = vmatpush1.msra.mxu0 0.0
  %1280 = vmatprep.subr.mxu0 0.0
  %1281 = vmatpush1.msra.mxu0 0.0
  %1282 = vmatprep.subr.mxu0 0.0
  %1283 = vmatpush1.msra.mxu0 0.0
  %1284 = vmatprep.subr.mxu0 0.0
  %1285 = vmatpush1.msra.mxu0 0.0
  %1286 = vmatprep.subr.mxu0 0.0
  %1287 = vmatpush1.msra.mxu0 0.0
  %1288 = vmatprep.subr.mxu0 0.0
  %1289 = vmatpush1.msra.mxu0 0.0
  %1290 = vmatprep.subr.mxu0 0.0
  %1291 = vmatpush1.msra.mxu0 0.0
  %1292 = vmatprep.subr.mxu0 0.0
  %1293 = vmatpush1.msra.mxu0 0.0
  %1294 = vmatprep.subr.mxu0 0.0
  %1295 = vmatpush1.msra.mxu0 0.0
  %1296 = vmatprep.subr.mxu0 0.0
  %1297 = vmatpush1.msra.mxu0 0.0
  %1298 = vmatprep.mubr.f32.mxu0 0.0
  %1299 = vmatmul.mubr.f32.gmra.mrb[0].mxu0 %v1108
  %v1300 = vpop.f32.mrb[0].mxu0
  %v1301 = vadd.f32 0.0, %v1300
  %v1302 = vpop.f32.mrb[0].mxu0
  %1303 = vdwg.mxu0
  %v1304 = vadd.f32 %v1112, %v1230
  %v1305 = vxor.u32 %v1304, 2147483648
  %v1306 = vmul.f32 %v1305, 1.442695
  %v1307 = vpow.pop %v1306
  %v1308 = vadd.f32 %v1307, 1.0
  %v1309 = vrcp.pop %v1308
  %v1310 = vmul.f32 1.0, %v1309
  %v1311 = vadd.f32 %v1113, %v1232
  %v1312 = vxor.u32 %v1311, 2147483648
  %v1313 = vmul.f32 %v1312, 1.442695
  %v1314 = vpow.pop %v1313
  %v1315 = vadd.f32 %v1314, 1.0
  %v1316 = vrcp.pop %v1315
  %v1317 = vmul.f32 1.0, %v1316
  %v1318 = vadd.f32 %v1301, %v30
  %v1319 = vmul.f32 %v1310, %v1318
  %v1320 = vadd.f32 %v1114, %v1319
  %v1321 = vtanh.pop %v1320
  %v1322 = vsub.f32 %v1108, %v1321
  %v1323 = vmul.f32 %v1317, %v1322
  %v1324 = vadd.f32 %v1321, %v1323
  %s1325 = scalar_lea.vmem %s4, 40
  %1326 = vst [vmem:[%s1325] sm:$0xff] %v1324
  %s1327 = scalar_lea.vmem %s0, 144
  %v1328 = vld [vmem:[%s1327] sm:$0xff]
  %v1329 = vld [vmem:[%s1327 + $0x8] sm:$0xff]
  %v1330 = vld [vmem:[%s1327 + $0x10] sm:$0xff]
  %v1331 = vld [vmem:[%s1] sm:$0xff]
  %v1332 = vld [vmem:[%s1 + $0x8] sm:$0xff]
  %v1333 = vld [vmem:[%s1 + $0x10] sm:$0xff]
  %v1334 = vld [vmem:[%s1 + $0x18] sm:$0xff]
  %v1335 = vld [vmem:[%s1 + $0x20] sm:$0xff]
  %v1336 = vld [vmem:[%s1 + $0x28] sm:$0xff]
  %v1337 = vld [vmem:[%s1 + $0x30] sm:$0xff]
  %v1338 = vld [vmem:[%s1 + $0x38] sm:$0xff]
  %v1339 = vld [vmem:[%s1 + $0x40] sm:$0xff]
  %v1340 = vld [vmem:[%s1 + $0x48] sm:$0xff]
  %v1341 = vld [vmem:[%s1 + $0x50] sm:$0xff]
  %v1342 = vld [vmem:[%s1 + $0x58] sm:$0xff]
  %v1343 = vld [vmem:[%s1 + $0x60] sm:$0xff]
  %v1344 = vld [vmem:[%s1 + $0x68] sm:$0xff]
  %v1345 = vld [vmem:[%s1 + $0x70] sm:$0xff]
  %v1346 = vld [vmem:[%s1 + $0x78] sm:$0xff]
  %v1347 = vld [vmem:[%s1 + $0x80] sm:$0xff]
  %v1348 = vld [vmem:[%s1 + $0x88] sm:$0xff]
  %v1349 = vld [vmem:[%s1 + $0x90] sm:$0xff]
  %v1350 = vld [vmem:[%s1 + $0x98] sm:$0xff]
  %v1351 = vld [vmem:[%s1 + $0xa0] sm:$0xff]
  %v1352 = vld [vmem:[%s1 + $0xa8] sm:$0xff]
  %v1353 = vld [vmem:[%s1 + $0xb0] sm:$0xff]
  %v1354 = vld [vmem:[%s1 + $0xb8] sm:$0xff]
  %v1355 = vld [vmem:[%s1 + $0xc0] sm:$0xff]
  %v1356 = vld [vmem:[%s1 + $0xc8] sm:$0xff]
  %v1357 = vld [vmem:[%s1 + $0xd0] sm:$0xff]
  %v1358 = vld [vmem:[%s1 + $0xd8] sm:$0xff]
  %v1359 = vld [vmem:[%s1 + $0xe0] sm:$0xff]
  %v1360 = vld [vmem:[%s1 + $0xe8] sm:$0xff]
  %v1361 = vld [vmem:[%s1 + $0xf0] sm:$0xff]
  %v1362 = vld [vmem:[%s1 + $0xf8] sm:$0xff]
  %v1363 = vld [vmem:[%s1 + $0x100] sm:$0xff]
  %v1364 = vld [vmem:[%s1 + $0x108] sm:$0xff]
  %v1365 = vld [vmem:[%s1 + $0x110] sm:$0xff]
  %v1366 = vld [vmem:[%s1 + $0x118] sm:$0xff]
  %v1367 = vld [vmem:[%s1 + $0x120] sm:$0xff]
  %v1368 = vld [vmem:[%s1 + $0x128] sm:$0xff]
  %v1369 = vld [vmem:[%s1 + $0x130] sm:$0xff]
  %v1370 = vld [vmem:[%s1 + $0x138] sm:$0xff]
  %v1371 = vld [vmem:[%s1 + $0x140] sm:$0xff]
  %v1372 = vld [vmem:[%s1 + $0x148] sm:$0xff]
  %v1373 = vld [vmem:[%s1 + $0x150] sm:$0xff]
  %v1374 = vld [vmem:[%s1 + $0x158] sm:$0xff]
  %v1375 = vld [vmem:[%s1 + $0x160] sm:$0xff]
  %v1376 = vld [vmem:[%s1 + $0x168] sm:$0xff]
  %v1377 = vld [vmem:[%s1 + $0x170] sm:$0xff]
  %v1378 = vld [vmem:[%s1 + $0x178] sm:$0xff]
  %1379 = vmatprep.subr.mxu0 %v1332
  %1380 = vmatpush1.msra.mxu0 %v1331
  %1381 = vmatprep.subr.mxu0 %v1335
  %1382 = vmatpush1.msra.mxu0 %v1334
  %1383 = vmatprep.subr.mxu0 %v1338
  %1384 = vmatpush1.msra.mxu0 %v1337
  %1385 = vmatprep.subr.mxu0 %v1341
  %1386 = vmatpush1.msra.mxu0 %v1340
  %1387 = vmatprep.subr.mxu0 %v1344
  %1388 = vmatpush1.msra.mxu0 %v1343
  %1389 = vmatprep.subr.mxu0 %v1347
  %1390 = vmatpush1.msra.mxu0 %v1346
  %1391 = vmatprep.subr.mxu0 %v1350
  %1392 = vmatpush1.msra.mxu0 %v1349
  %1393 = vmatprep.subr.mxu0 %v1353
  %1394 = vmatpush1.msra.mxu0 %v1352
  %1395 = vmatprep.subr.mxu0 %v1356
  %1396 = vmatpush1.msra.mxu0 %v1355
  %1397 = vmatprep.subr.mxu0 %v1359
  %1398 = vmatpush1.msra.mxu0 %v1358
  %1399 = vmatprep.subr.mxu0 %v1362
  %1400 = vmatpush1.msra.mxu0 %v1361
  %1401 = vmatprep.subr.mxu0 %v1365
  %1402 = vmatpush1.msra.mxu0 %v1364
  %1403 = vmatprep.subr.mxu0 %v1368
  %1404 = vmatpush1.msra.mxu0 %v1367
  %1405 = vmatprep.subr.mxu0 %v1371
  %1406 = vmatpush1.msra.mxu0 %v1370
  %1407 = vmatprep.subr.mxu0 %v1374
  %1408 = vmatpush1.msra.mxu0 %v1373
  %1409 = vmatprep.subr.mxu0 %v1377
  %1410 = vmatpush1.msra.mxu0 %v1376
  %1411 = vmatprep.subr.mxu0 0.0
  %1412 = vmatpush1.msra.mxu0 0.0
  %1413 = vmatprep.subr.mxu0 0.0
  %1414 = vmatpush1.msra.mxu0 0.0
  %1415 = vmatprep.subr.mxu0 0.0
  %1416 = vmatpush1.msra.mxu0 0.0
  %1417 = vmatprep.subr.mxu0 0.0
  %1418 = vmatpush1.msra.mxu0 0.0
  %1419 = vmatprep.subr.mxu0 0.0
  %1420 = vmatpush1.msra.mxu0 0.0
  %1421 = vmatprep.subr.mxu0 0.0
  %1422 = vmatpush1.msra.mxu0 0.0
  %1423 = vmatprep.subr.mxu0 0.0
  %1424 = vmatpush1.msra.mxu0 0.0
  %1425 = vmatprep.subr.mxu0 0.0
  %1426 = vmatpush1.msra.mxu0 0.0
  %1427 = vmatprep.subr.mxu0 0.0
  %1428 = vmatpush1.msra.mxu0 0.0
  %1429 = vmatprep.subr.mxu0 0.0
  %1430 = vmatpush1.msra.mxu0 0.0
  %1431 = vmatprep.subr.mxu0 0.0
  %1432 = vmatpush1.msra.mxu0 0.0
  %1433 = vmatprep.subr.mxu0 0.0
  %1434 = vmatpush1.msra.mxu0 0.0
  %1435 = vmatprep.subr.mxu0 0.0
  %1436 = vmatpush1.msra.mxu0 0.0
  %1437 = vmatprep.subr.mxu0 0.0
  %1438 = vmatpush1.msra.mxu0 0.0
  %1439 = vmatprep.subr.mxu0 0.0
  %1440 = vmatpush1.msra.mxu0 0.0
  %1441 = vmatprep.subr.mxu0 0.0
  %1442 = vmatpush1.msra.mxu0 0.0
  %1443 = vmatprep.mubr.f32.mxu0 0.0
  %1444 = vmatmul.mubr.f32.gmra.mrb[0].mxu0 %v1324
  %v1445 = vpop.f32.mrb[0].mxu0
  %v1446 = vadd.f32 0.0, %v1445
  %v1447 = vpop.f32.mrb[0].mxu0
  %v1448 = vadd.f32 0.0, %v1447
  %1449 = vdwg.mxu0
  %1450 = vmatprep.subr.mxu0 0.0
  %1451 = vmatpush1.msra.mxu0 %v1333
  %1452 = vmatprep.subr.mxu0 0.0
  %1453 = vmatpush1.msra.mxu0 %v1336
  %1454 = vmatprep.subr.mxu0 0.0
  %1455 = vmatpush1.msra.mxu0 %v1339
  %1456 = vmatprep.subr.mxu0 0.0
  %1457 = vmatpush1.msra.mxu0 %v1342
  %1458 = vmatprep.subr.mxu0 0.0
  %1459 = vmatpush1.msra.mxu0 %v1345
  %1460 = vmatprep.subr.mxu0 0.0
  %1461 = vmatpush1.msra.mxu0 %v1348
  %1462 = vmatprep.subr.mxu0 0.0
  %1463 = vmatpush1.msra.mxu0 %v1351
  %1464 = vmatprep.subr.mxu0 0.0
  %1465 = vmatpush1.msra.mxu0 %v1354
  %1466 = vmatprep.subr.mxu0 0.0
  %1467 = vmatpush1.msra.mxu0 %v1357
  %1468 = vmatprep.subr.mxu0 0.0
  %1469 = vmatpush1.msra.mxu0 %v1360
  %1470 = vmatprep.subr.mxu0 0.0
  %1471 = vmatpush1.msra.mxu0 %v1363
  %1472 = vmatprep.subr.mxu0 0.0
  %1473 = vmatpush1.msra.mxu0 %v1366
  %1474 = vmatprep.subr.mxu0 0.0
  %1475 = vmatpush1.msra.mxu0 %v1369
  %1476 = vmatprep.subr.mxu0 0.0
  %1477 = vmatpush1.msra.mxu0 %v1372
  %1478 = vmatprep.subr.mxu0 0.0
  %1479 = vmatpush1.msra.mxu0 %v1375
  %1480 = vmatprep.subr.mxu0 0.0
  %1481 = vmatpush1.msra.mxu0 %v1378
  %1482 = vmatprep.subr.mxu0 0.0
  %1483 = vmatpush1.msra.mxu0 0.0
  %1484 = vmatprep.subr.mxu0 0.0
  %1485 = vmatpush1.msra.mxu0 0.0
  %1486 = vmatprep.subr.mxu0 0.0
  %1487 = vmatpush1.msra.mxu0 0.0
  %1488 = vmatprep.subr.mxu0 0.0
  %1489 = vmatpush1.msra.mxu0 0.0
  %1490 = vmatprep.subr.mxu0 0.0
  %1491 = vmatpush1.msra.mxu0 0.0
  %1492 = vmatprep.subr.mxu0 0.0
  %1493 = vmatpush1.msra.mxu0 0.0
  %1494 = vmatprep.subr.mxu0 0.0
  %1495 = vmatpush1.msra.mxu0 0.0
  %1496 = vmatprep.subr.mxu0 0.0
  %1497 = vmatpush1.msra.mxu0 0.0
  %1498 = vmatprep.subr.mxu0 0.0
  %1499 = vmatpush1.msra.mxu0 0.0
  %1500 = vmatprep.subr.mxu0 0.0
  %1501 = vmatpush1.msra.mxu0 0.0
  %1502 = vmatprep.subr.mxu0 0.0
  %1503 = vmatpush1.msra.mxu0 0.0
  %1504 = vmatprep.subr.mxu0 0.0
  %1505 = vmatpush1.msra.mxu0 0.0
  %1506 = vmatprep.subr.mxu0 0.0
  %1507 = vmatpush1.msra.mxu0 0.0
  %1508 = vmatprep.subr.mxu0 0.0
  %1509 = vmatpush1.msra.mxu0 0.0
  %1510 = vmatprep.subr.mxu0 0.0
  %1511 = vmatpush1.msra.mxu0 0.0
  %1512 = vmatprep.subr.mxu0 0.0
  %1513 = vmatpush1.msra.mxu0 0.0
  %1514 = vmatprep.mubr.f32.mxu0 0.0
  %1515 = vmatmul.mubr.f32.gmra.mrb[0].mxu0 %v1324
  %v1516 = vpop.f32.mrb[0].mxu0
  %v1517 = vadd.f32 0.0, %v1516
  %v1518 = vpop.f32.mrb[0].mxu0
  %1519 = vdwg.mxu0
  %v1520 = vadd.f32 %v1328, %v1446
  %v1521 = vxor.u32 %v1520, 2147483648
  %v1522 = vmul.f32 %v1521, 1.442695
  %v1523 = vpow.pop %v1522
  %v1524 = vadd.f32 %v1523, 1.0
  %v1525 = vrcp.pop %v1524
  %v1526 = vmul.f32 1.0, %v1525
  %v1527 = vadd.f32 %v1329, %v1448
  %v1528 = vxor.u32 %v1527, 2147483648
  %v1529 = vmul.f32 %v1528, 1.442695
  %v1530 = vpow.pop %v1529
  %v1531 = vadd.f32 %v1530, 1.0
  %v1532 = vrcp.pop %v1531
  %v1533 = vmul.f32 1.0, %v1532
  %v1534 = vadd.f32 %v1517, %v30
  %v1535 = vmul.f32 %v1526, %v1534
  %v1536 = vadd.f32 %v1330, %v1535
  %v1537 = vtanh.pop %v1536
  %v1538 = vsub.f32 %v1324, %v1537
  %v1539 = vmul.f32 %v1533, %v1538
  %v1540 = vadd.f32 %v1537, %v1539
  %s1541 = scalar_lea.vmem %s4, 48
  %1542 = vst [vmem:[%s1541] sm:$0xff] %v1540
  %s1543 = scalar_lea.vmem %s0, 168
  %v1544 = vld [vmem:[%s1543] sm:$0xff]
  %v1545 = vld [vmem:[%s1543 + $0x8] sm:$0xff]
  %v1546 = vld [vmem:[%s1543 + $0x10] sm:$0xff]
  %v1547 = vld [vmem:[%s1] sm:$0xff]
  %v1548 = vld [vmem:[%s1 + $0x8] sm:$0xff]
  %v1549 = vld [vmem:[%s1 + $0x10] sm:$0xff]
  %v1550 = vld [vmem:[%s1 + $0x18] sm:$0xff]
  %v1551 = vld [vmem:[%s1 + $0x20] sm:$0xff]
  %v1552 = vld [vmem:[%s1 + $0x28] sm:$0xff]
  %v1553 = vld [vmem:[%s1 + $0x30] sm:$0xff]
  %v1554 = vld [vmem:[%s1 + $0x38] sm:$0xff]
  %v1555 = vld [vmem:[%s1 + $0x40] sm:$0xff]
  %v1556 = vld [vmem:[%s1 + $0x48] sm:$0xff]
  %v1557 = vld [vmem:[%s1 + $0x50] sm:$0xff]
  %v1558 = vld [vmem:[%s1 + $0x58] sm:$0xff]
  %v1559 = vld [vmem:[%s1 + $0x60] sm:$0xff]
  %v1560 = vld [vmem:[%s1 + $0x68] sm:$0xff]
  %v1561 = vld [vmem:[%s1 + $0x70] sm:$0xff]
  %v1562 = vld [vmem:[%s1 + $0x78] sm:$0xff]
  %v1563 = vld [vmem:[%s1 + $0x80] sm:$0xff]
  %v1564 = vld [vmem:[%s1 + $0x88] sm:$0xff]
  %v1565 = vld [vmem:[%s1 + $0x90] sm:$0xff]
  %v1566 = vld [vmem:[%s1 + $0x98] sm:$0xff]
  %v1567 = vld [vmem:[%s1 + $0xa0] sm:$0xff]
  %v1568 = vld [vmem:[%s1 + $0xa8] sm:$0xff]
  %v1569 = vld [vmem:[%s1 + $0xb0] sm:$0xff]
  %v1570 = vld [vmem:[%s1 + $0xb8] sm:$0xff]
  %v1571 = vld [vmem:[%s1 + $0xc0] sm:$0xff]
  %v1572 = vld [vmem:[%s1 + $0xc8] sm:$0xff]
  %v1573 = vld [vmem:[%s1 + $0xd0] sm:$0xff]
  %v1574 = vld [vmem:[%s1 + $0xd8] sm:$0xff]
  %v1575 = vld [vmem:[%s1 + $0xe0] sm:$0xff]
  %v1576 = vld [vmem:[%s1 + $0xe8] sm:$0xff]
  %v1577 = vld [vmem:[%s1 + $0xf0] sm:$0xff]
  %v1578 = vld [vmem:[%s1 + $0xf8] sm:$0xff]
  %v1579 = vld [vmem:[%s1 + $0x100] sm:$0xff]
  %v1580 = vld [vmem:[%s1 + $0x108] sm:$0xff]
  %v1581 = vld [vmem:[%s1 + $0x110] sm:$0xff]
  %v1582 = vld [vmem:[%s1 + $0x118] sm:$0xff]
  %v1583 = vld [vmem:[%s1 + $0x120] sm:$0xff]
  %v1584 = vld [vmem:[%s1 + $0x128] sm:$0xff]
  %v1585 = vld [vmem:[%s1 + $0x130] sm:$0xff]
  %v1586 = vld [vmem:[%s1 + $0x138] sm:$0xff]
  %v1587 = vld [vmem:[%s1 + $0x140] sm:$0xff]
  %v1588 = vld [vmem:[%s1 + $0x148] sm:$0xff]
  %v1589 = vld [vmem:[%s1 + $0x150] sm:$0xff]
  %v1590 = vld [vmem:[%s1 + $0x158] sm:$0xff]
  %v1591 = vld [vmem:[%s1 + $0x160] sm:$0xff]
  %v1592 = vld [vmem:[%s1 + $0x168] sm:$0xff]
  %v1593 = vld [vmem:[%s1 + $0x170] sm:$0xff]
  %v1594 = vld [vmem:[%s1 + $0x178] sm:$0xff]
  %1595 = vmatprep.subr.mxu0 %v1548
  %1596 = vmatpush1.msra.mxu0 %v1547
  %1597 = vmatprep.subr.mxu0 %v1551
  %1598 = vmatpush1.msra.mxu0 %v1550
  %1599 = vmatprep.subr.mxu0 %v1554
  %1600 = vmatpush1.msra.mxu0 %v1553
  %1601 = vmatprep.subr.mxu0 %v1557
  %1602 = vmatpush1.msra.mxu0 %v1556
  %1603 = vmatprep.subr.mxu0 %v1560
  %1604 = vmatpush1.msra.mxu0 %v1559
  %1605 = vmatprep.subr.mxu0 %v1563
  %1606 = vmatpush1.msra.mxu0 %v1562
  %1607 = vmatprep.subr.mxu0 %v1566
  %1608 = vmatpush1.msra.mxu0 %v1565
  %1609 = vmatprep.subr.mxu0 %v1569
  %1610 = vmatpush1.msra.mxu0 %v1568
  %1611 = vmatprep.subr.mxu0 %v1572
  %1612 = vmatpush1.msra.mxu0 %v1571
  %1613 = vmatprep.subr.mxu0 %v1575
  %1614 = vmatpush1.msra.mxu0 %v1574
  %1615 = vmatprep.subr.mxu0 %v1578
  %1616 = vmatpush1.msra.mxu0 %v1577
  %1617 = vmatprep.subr.mxu0 %v1581
  %1618 = vmatpush1.msra.mxu0 %v1580
  %1619 = vmatprep.subr.mxu0 %v1584
  %1620 = vmatpush1.msra.mxu0 %v1583
  %1621 = vmatprep.subr.mxu0 %v1587
  %1622 = vmatpush1.msra.mxu0 %v1586
  %1623 = vmatprep.subr.mxu0 %v1590
  %1624 = vmatpush1.msra.mxu0 %v1589
  %1625 = vmatprep.subr.mxu0 %v1593
  %1626 = vmatpush1.msra.mxu0 %v1592
  %1627 = vmatprep.subr.mxu0 0.0
  %1628 = vmatpush1.msra.mxu0 0.0
  %1629 = vmatprep.subr.mxu0 0.0
  %1630 = vmatpush1.msra.mxu0 0.0
  %1631 = vmatprep.subr.mxu0 0.0
  %1632 = vmatpush1.msra.mxu0 0.0
  %1633 = vmatprep.subr.mxu0 0.0
  %1634 = vmatpush1.msra.mxu0 0.0
  %1635 = vmatprep.subr.mxu0 0.0
  %1636 = vmatpush1.msra.mxu0 0.0
  %1637 = vmatprep.subr.mxu0 0.0
  %1638 = vmatpush1.msra.mxu0 0.0
  %1639 = vmatprep.subr.mxu0 0.0
  %1640 = vmatpush1.msra.mxu0 0.0
  %1641 = vmatprep.subr.mxu0 0.0
  %1642 = vmatpush1.msra.mxu0 0.0
  %1643 = vmatprep.subr.mxu0 0.0
  %1644 = vmatpush1.msra.mxu0 0.0
  %1645 = vmatprep.subr.mxu0 0.0
  %1646 = vmatpush1.msra.mxu0 0.0
  %1647 = vmatprep.subr.mxu0 0.0
  %1648 = vmatpush1.msra.mxu0 0.0
  %1649 = vmatprep.subr.mxu0 0.0
  %1650 = vmatpush1.msra.mxu0 0.0
  %1651 = vmatprep.subr.mxu0 0.0
  %1652 = vmatpush1.msra.mxu0 0.0
  %1653 = vmatprep.subr.mxu0 0.0
  %1654 = vmatpush1.msra.mxu0 0.0
  %1655 = vmatprep.subr.mxu0 0.0
  %1656 = vmatpush1.msra.mxu0 0.0
  %1657 = vmatprep.subr.mxu0 0.0
  %1658 = vmatpush1.msra.mxu0 0.0
  %1659 = vmatprep.mubr.f32.mxu0 0.0
  %1660 = vmatmul.mubr.f32.gmra.mrb[0].mxu0 %v1540
  %v1661 = vpop.f32.mrb[0].mxu0
  %v1662 = vadd.f32 0.0, %v1661
  %v1663 = vpop.f32.mrb[0].mxu0
  %v1664 = vadd.f32 0.0, %v1663
  %1665 = vdwg.mxu0
  %1666 = vmatprep.subr.mxu0 0.0
  %1667 = vmatpush1.msra.mxu0 %v1549
  %1668 = vmatprep.subr.mxu0 0.0
  %1669 = vmatpush1.msra.mxu0 %v1552
  %1670 = vmatprep.subr.mxu0 0.0
  %1671 = vmatpush1.msra.mxu0 %v1555
  %1672 = vmatprep.subr.mxu0 0.0
  %1673 = vmatpush1.msra.mxu0 %v1558
  %1674 = vmatprep.subr.mxu0 0.0
  %1675 = vmatpush1.msra.mxu0 %v1561
  %1676 = vmatprep.subr.mxu0 0.0
  %1677 = vmatpush1.msra.mxu0 %v1564
  %1678 = vmatprep.subr.mxu0 0.0
  %1679 = vmatpush1.msra.mxu0 %v1567
  %1680 = vmatprep.subr.mxu0 0.0
  %1681 = vmatpush1.msra.mxu0 %v1570
  %1682 = vmatprep.subr.mxu0 0.0
  %1683 = vmatpush1.msra.mxu0 %v1573
  %1684 = vmatprep.subr.mxu0 0.0
  %1685 = vmatpush1.msra.mxu0 %v1576
  %1686 = vmatprep.subr.mxu0 0.0
  %1687 = vmatpush1.msra.mxu0 %v1579
  %1688 = vmatprep.subr.mxu0 0.0
  %1689 = vmatpush1.msra.mxu0 %v1582
  %1690 = vmatprep.subr.mxu0 0.0
  %1691 = vmatpush1.msra.mxu0 %v1585
  %1692 = vmatprep.subr.mxu0 0.0
  %1693 = vmatpush1.msra.mxu0 %v1588
  %1694 = vmatprep.subr.mxu0 0.0
  %1695 = vmatpush1.msra.mxu0 %v1591
  %1696 = vmatprep.subr.mxu0 0.0
  %1697 = vmatpush1.msra.mxu0 %v1594
  %1698 = vmatprep.subr.mxu0 0.0
  %1699 = vmatpush1.msra.mxu0 0.0
  %1700 = vmatprep.subr.mxu0 0.0
  %1701 = vmatpush1.msra.mxu0 0.0
  %1702 = vmatprep.subr.mxu0 0.0
  %1703 = vmatpush1.msra.mxu0 0.0
  %1704 = vmatprep.subr.mxu0 0.0
  %1705 = vmatpush1.msra.mxu0 0.0
  %1706 = vmatprep.subr.mxu0 0.0
  %1707 = vmatpush1.msra.mxu0 0.0
  %1708 = vmatprep.subr.mxu0 0.0
  %1709 = vmatpush1.msra.mxu0 0.0
  %1710 = vmatprep.subr.mxu0 0.0
  %1711 = vmatpush1.msra.mxu0 0.0
  %1712 = vmatprep.subr.mxu0 0.0
  %1713 = vmatpush1.msra.mxu0 0.0
  %1714 = vmatprep.subr.mxu0 0.0
  %1715 = vmatpush1.msra.mxu0 0.0
  %1716 = vmatprep.subr.mxu0 0.0
  %1717 = vmatpush1.msra.mxu0 0.0
  %1718 = vmatprep.subr.mxu0 0.0
  %1719 = vmatpush1.msra.mxu0 0.0
  %1720 = vmatprep.subr.mxu0 0.0
  %1721 = vmatpush1.msra.mxu0 0.0
  %1722 = vmatprep.subr.mxu0 0.0
  %1723 = vmatpush1.msra.mxu0 0.0
  %1724 = vmatprep.subr.mxu0 0.0
  %1725 = vmatpush1.msra.mxu0 0.0
  %1726 = vmatprep.subr.mxu0 0.0
  %1727 = vmatpush1.msra.mxu0 0.0
  %1728 = vmatprep.subr.mxu0 0.0
  %1729 = vmatpush1.msra.mxu0 0.0
  %1730 = vmatprep.mubr.f32.mxu0 0.0
  %1731 = vmatmul.mubr.f32.gmra.mrb[0].mxu0 %v1540
  %v1732 = vpop.f32.mrb[0].mxu0
  %v1733 = vadd.f32 0.0, %v1732
  %v1734 = vpop.f32.mrb[0].mxu0
  %1735 = vdwg.mxu0
  %v1736 = vadd.f32 %v1544, %v1662
  %v1737 = vxor.u32 %v1736, 2147483648
  %v1738 = vmul.f32 %v1737, 1.442695
  %v1739 = vpow.pop %v1738
  %v1740 = vadd.f32 %v1739, 1.0
  %v1741 = vrcp.pop %v1740
  %v1742 = vmul.f32 1.0, %v1741
  %v1743 = vadd.f32 %v1545, %v1664
  %v1744 = vxor.u32 %v1743, 2147483648
  %v1745 = vmul.f32 %v1744, 1.442695
  %v1746 = vpow.pop %v1745
  %v1747 = vadd.f32 %v1746, 1.0
  %v1748 = vrcp.pop %v1747
  %v1749 = vmul.f32 1.0, %v1748
  %v1750 = vadd.f32 %v1733, %v30
  %v1751 = vmul.f32 %v1742, %v1750
  %v1752 = vadd.f32 %v1546, %v1751
  %v1753 = vtanh.pop %v1752
  %v1754 = vsub.f32 %v1540, %v1753
  %v1755 = vmul.f32 %v1749, %v1754
  %v1756 = vadd.f32 %v1753, %v1755
  %s1757 = scalar_lea.vmem %s4, 56
  %1758 = vst [vmem:[%s1757] sm:$0xff] %v1756
  %1759 = vst [vmem:[#allocation2] sm:$0xff] %v1756
  // Predicated region
  $region22: #{base_rnn_forward.2} parent=0 // pred_check
    %p1760 = pneg %p19
  $region23: #{base_rnn_forward.2} parent=0 // pred_check_branch
    %1762 = sbr.rel (%p1760) target = $region25
  $region24: #{base_rnn_forward.2} parent=0 // pred_region
    %1763 = vst [vmem:[%s5] sm:$0xff] %v1756
  $region25: #{base_rnn_forward.2} parent=0 // pred_fallthru
    _
  // Predicated region
  $region26: #{base_rnn_forward.2} parent=0 // pred_check
    _
  $region27: #{base_rnn_forward.2} parent=0 // pred_check_branch
    %1765 = sbr.rel (0) target = $region29
  $region28: #{base_rnn_forward.2} parent=0 // pred_region
    _
  $region29: #{base_rnn_forward.2} parent=0 // pred_fallthru
    _
  // Predicated region
  $region30: #{base_rnn_forward.2} parent=0 // pred_check
    _
  $region31: #{base_rnn_forward.2} parent=0 // pred_check_branch
    %1767 = sbr.rel (0) target = $region33
  $region32: #{base_rnn_forward.2} parent=0 // pred_region
    _
  $region33: #{base_rnn_forward.2} parent=0 // pred_fallthru
    _
  // Predicated region
  $region34: #{base_rnn_forward.2} parent=0 // pred_check
    _
  $region35: #{base_rnn_forward.2} parent=0 // pred_check_branch
    %1769 = sbr.rel (0) target = $region37
  $region36: #{base_rnn_forward.2} parent=0 // pred_region
    _
  $region37: #{base_rnn_forward.2} parent=0 // pred_fallthru
    _
  // Predicated region
  $region38: #{base_rnn_forward.2} parent=0 // pred_check
    _
  $region39: #{base_rnn_forward.2} parent=0 // pred_check_branch
    %1771 = sbr.rel (0) target = $region41
  $region40: #{base_rnn_forward.2} parent=0 // pred_region
    _
  $region41: #{base_rnn_forward.2} parent=0 // pred_fallthru
    _

</llo_original>
